<compile_context>
chip_gen: v5e
topology: v5e:2x2
jax: 0.10.0
libtpu: 0.0.40
codegen_flags: <defaults>
</compile_context>

<pallas_src>
import jax
import jax.numpy as jnp
from jax import lax
from jax.experimental import pallas as pl
from jax.experimental.pallas import tpu as pltpu

BN_EPS = 1e-5

_X_BLOCK_BYTES_TARGET = 2 * 1024 * 1024     # ~2 MiB of x per grid step
_MIN_LANES = 2048
_MAX_VMEM_LIMIT = 96 * 1024 * 1024          # cap for 128 MiB parts (v5e/v6e)
_FALLBACK_VMEM_PHYS = 64 * 1024 * 1024      # v7x per-TensorCore physical VMEM

_vmem_phys_cache = [None]


def _vmem_physical_bytes():
    """Best-effort physical-VMEM query; conservative fallback (v7x size)."""
    if _vmem_phys_cache[0] is None:
        phys = _FALLBACK_VMEM_PHYS
        try:
            info = pltpu.get_tpu_info()
            for attr in ("vmem_capacity_bytes", "vmem_bytes", "vmem_size_bytes"):
                v = getattr(info, attr, None)
                if v:
                    phys = int(v)
                    break
        except Exception:
            pass
        _vmem_phys_cache[0] = phys
    return _vmem_phys_cache[0]


def _round_up(x, m):
    return ((x + m - 1) // m) * m


def _cdiv(a, b):
    return -(-a // b)


def _choose_tiling(L, C, Co, H, N, tile_budget_bytes):
    """Byte-sized L tile: (TL, NLT, L_pad) with TL*NLT == L_pad >= L."""
    L128 = _round_up(max(L, 1), 128)
    # ~2 MiB of x per block (at least 2048 lanes).
    tl = max(_MIN_LANES, _X_BLOCK_BYTES_TARGET // (4 * max(C, 1)))
    # Cap by the VMEM footprint of the heaviest (final) pass:
    #   2x x-block + 2x out-block + h + y (all f32, per lane).
    per_lane = 4 * (2 * C + 2 * Co + H + max(H, Co))
    tl = min(tl, max(128, tile_budget_bytes // per_lane))
    tl = max(128, (tl // 128) * 128)
    tl = min(tl, L128)
    # Keep >= ~4 total parallel grid steps when L allows (v7x has 2 TCs).
    want_nlt = min(_cdiv(4, max(N, 1)), L128 // 128)
    nlt = max(_cdiv(L128, tl), max(1, want_nlt))
    tl = _round_up(_cdiv(L128, nlt), 128)   # rebalance; never exceeds budgeted tl
    return tl, nlt, nlt * tl


# ----------------------------- kernels ------------------------------------


def _prelu(v, alpha):
    return jnp.where(v > 0, v, alpha * v)


def _zero_stats(sum_ref, ssq_ref):
    @pl.when(pl.program_id(1) == 0)
    def _():
        sum_ref[...] = jnp.zeros_like(sum_ref)
        ssq_ref[...] = jnp.zeros_like(ssq_ref)


def _stats1_kernel(x_ref, w1_ref, sum_ref, ssq_ref):
    """conv1 + BN1 partial sums, accumulated over the L-tile (reduction) axis."""
    _zero_stats(sum_ref, ssq_ref)
    h = jnp.dot(w1_ref[...], x_ref[0], preferred_element_type=jnp.float32)
    sum_ref[0] += jnp.sum(h, axis=1, keepdims=True)
    ssq_ref[0] += jnp.sum(h * h, axis=1, keepdims=True)


def _stats1_write_h_kernel(x_ref, w1_ref, h_ref, sum_ref, ssq_ref):
    """Same as _stats1_kernel but also spills raw h = W1@x to HBM (2H < C)."""
    _zero_stats(sum_ref, ssq_ref)
    h = jnp.dot(w1_ref[...], x_ref[0], preferred_element_type=jnp.float32)
    h_ref[0] = h
    sum_ref[0] += jnp.sum(h, axis=1, keepdims=True)
    ssq_ref[0] += jnp.sum(h * h, axis=1, keepdims=True)


def _stats2_from_x_kernel(x_ref, w1s_ref, sh1_ref, a1_ref, w2_ref,
                          sum_ref, ssq_ref):
    """Recompute conv1 (BN1 scale folded into w1s) -> BN2 partial sums."""
    _zero_stats(sum_ref, ssq_ref)
    h = jnp.dot(w1s_ref[...], x_ref[0],
                preferred_element_type=jnp.float32) + sh1_ref[...]
    h = _prelu(h, a1_ref[0, 0])               # shared-alpha PReLU (SMEM scalar)
    y = jnp.dot(w2_ref[...], h, preferred_element_type=jnp.float32)
    sum_ref[0] += jnp.sum(y, axis=1, keepdims=True)
    ssq_ref[0] += jnp.sum(y * y, axis=1, keepdims=True)


def _stats2_from_h_kernel(h_ref, sc1_ref, sh1_ref, a1_ref, w2_ref,
                          sum_ref, ssq_ref):
    """Read spilled h from HBM (2H < C path) -> BN2 partial sums."""
    _zero_stats(sum_ref, ssq_ref)
    h = h_ref[0] * sc1_ref[...] + sh1_ref[...]
    h = _prelu(h, a1_ref[0, 0])
    y = jnp.dot(w2_ref[...], h, preferred_element_type=jnp.float32)
    sum_ref[0] += jnp.sum(y, axis=1, keepdims=True)
    ssq_ref[0] += jnp.sum(y * y, axis=1, keepdims=True)


def _final_kernel(x_ref, w1s_ref, sh1_ref, a1_ref,
                  w2s_ref, sh2_ref, a2_ref, o_ref):
    """Full block (BN scales folded into weights) + residual add."""
    x = x_ref[0]                                                     # (C, TL)
    h = jnp.dot(w1s_ref[...], x,
                preferred_element_type=jnp.float32) + sh1_ref[...]  # (H, TL)
    h = _prelu(h, a1_ref[0, 0])
    y = jnp.dot(w2s_ref[...], h,
                preferred_element_type=jnp.float32) + sh2_ref[...]  # (Co, TL)
    y = _prelu(y, a2_ref[0, 0])
    o_ref[0] = (x + y).astype(o_ref.dtype)        # lane-dense residual store


# ----------------------------- wrapper -------------------------------------


def _cost(flops, bytes_accessed):
    return pl.CostEstimate(flops=int(flops), transcendentals=0,
                           bytes_accessed=int(bytes_accessed))


@jax.jit
def residual_layer(x_ncl, params):
    """x_ncl: (N, C, L) float32.  Returns (N, C, L) float32."""
    (w1, b1, g1, be1, a1, w2, b2, g2, be2, a2) = params
    # Constant per-channel bias immediately followed by training-mode BN is a
    # forward-pass no-op (the batch mean absorbs it) -> drop the bias adds.
    del b1, b2

    N, C, L = x_ncl.shape
    H = w1.shape[0]
    Co = w2.shape[0]
    assert Co == C, "residual add requires out_dim == in_dim"
    M = N * L

    # Per-generation VMEM budget.
    phys = _vmem_physical_bytes()
    vmem_limit = min(phys * 3 // 4, _MAX_VMEM_LIMIT)   # ~96 MiB v5e/v6e, 48 MiB v7x
    tile_budget = vmem_limit // 2                      # headroom for compiler scratch
    TL, NLT, L_pad = _choose_tiling(L, C, Co, H, N, tile_budget)
    M_pad = N * L_pad

    # Pad L up to NLT*TL so every block is lane-dense / (8,128)-aligned.
    x_p = x_ncl if L_pad == L else jnp.pad(x_ncl, ((0, 0), (0, 0), (0, L_pad - L)))

    grid = (N, NLT)
    write_h = (2 * H < C)   # spilling h beats re-reading x only when 2H < C

    # ---- specs ----
    x_spec = pl.BlockSpec((1, C, TL), lambda n, l: (n, 0, l))
    h_io_spec = pl.BlockSpec((1, H, TL), lambda n, l: (n, 0, l))
    o_spec = pl.BlockSpec((1, Co, TL), lambda n, l: (n, 0, l))
    w1_spec = pl.BlockSpec((H, C), lambda n, l: (0, 0))           # VMEM-resident
    w2_spec = pl.BlockSpec((Co, H), lambda n, l: (0, 0))          # VMEM-resident
    ch_h_spec = pl.BlockSpec((H, 1), lambda n, l: (0, 0))         # per-chan scale/shift
    ch_c_spec = pl.BlockSpec((Co, 1), lambda n, l: (0, 0))
    smem_spec = pl.BlockSpec(memory_space=pltpu.MemorySpace.SMEM)
    # Stats outputs: resident across the L-tile axis (accumulator pattern).
    stat_h_spec = pl.BlockSpec((1, H, 1), lambda n, l: (n, 0, 0))
    stat_c_spec = pl.BlockSpec((1, Co, 1), lambda n, l: (n, 0, 0))

    cparams_stats = pltpu.CompilerParams(
        dimension_semantics=("parallel", "arbitrary"),
        vmem_limit_bytes=vmem_limit)
    cparams_final = pltpu.CompilerParams(
        dimension_semantics=("parallel", "parallel"),
        vmem_limit_bytes=vmem_limit)

    a1s = jnp.asarray(a1, jnp.float32).reshape(1, 1)
    a2s = jnp.asarray(a2, jnp.float32).reshape(1, 1)

    stat_h_shape = jax.ShapeDtypeStruct((N, H, 1), jnp.float32)
    stat_c_shape = jax.ShapeDtypeStruct((N, Co, 1), jnp.float32)

    # ---- pass 1: conv1 + BN1 batch statistics ----
    if write_h:
        h_hbm, sum1, ssq1 = pl.pallas_call(
            _stats1_write_h_kernel,
            grid=grid,
            in_specs=[x_spec, w1_spec],
            out_specs=(h_io_spec, stat_h_spec, stat_h_spec),
            out_shape=(jax.ShapeDtypeStruct((N, H, L_pad), jnp.float32),
                       stat_h_shape, stat_h_shape),
            compiler_params=cparams_stats,
            cost_estimate=_cost(2 * M_pad * C * H + 3 * M_pad * H,
                                4 * (M_pad * C + M_pad * H + H * C + 2 * N * H)),
        )(x_p, w1)
    else:
        h_hbm = None
        sum1, ssq1 = pl.pallas_call(
            _stats1_kernel,
            grid=grid,
            in_specs=[x_spec, w1_spec],
            out_specs=(stat_h_spec, stat_h_spec),
            out_shape=(stat_h_shape, stat_h_shape),
            compiler_params=cparams_stats,
            cost_estimate=_cost(2 * M_pad * C * H + 3 * M_pad * H,
                                4 * (M_pad * C + H * C + 2 * N * H)),
        )(x_p, w1)

    # Padded (zero) columns contribute exactly 0 to sum/ssq; divide by true M.
    s1 = jnp.sum(sum1, axis=0)                               # (H, 1)
    q1 = jnp.sum(ssq1, axis=0)
    mean1 = s1 / M
    # TODO(synk): single-pass E[h^2]-mean^2 can lose precision if |mean| >> std.
    var1 = jnp.maximum(q1 / M - mean1 * mean1, 0.0)          # biased (training BN)
    sc1 = g1.reshape(H, 1) * lax.rsqrt(var1 + BN_EPS)
    sh1 = be1.reshape(H, 1) - mean1 * sc1
    w1s = sc1 * w1                                           # fold BN1 scale into conv1

    # ---- pass 2: BN2 batch statistics ----
    if write_h:
        sum2, ssq2 = pl.pallas_call(
            _stats2_from_h_kernel,
            grid=grid,
            in_specs=[h_io_spec, ch_h_spec, ch_h_spec, smem_spec, w2_spec],
            out_specs=(stat_c_spec, stat_c_spec),
            out_shape=(stat_c_shape, stat_c_shape),
            compiler_params=cparams_stats,
            cost_estimate=_cost(2 * M_pad * H * Co + 5 * M_pad * H + 3 * M_pad * Co,
                                4 * (M_pad * H + Co * H + 2 * H + 2 * N * Co)),
        )(h_hbm, sc1, sh1, a1s, w2)
    else:
        sum2, ssq2 = pl.pallas_call(
            _stats2_from_x_kernel,
            grid=grid,
            in_specs=[x_spec, w1_spec, ch_h_spec, smem_spec, w2_spec],
            out_specs=(stat_c_spec, stat_c_spec),
            out_shape=(stat_c_shape, stat_c_shape),
            compiler_params=cparams_stats,
            cost_estimate=_cost(2 * M_pad * C * H + 2 * M_pad * H * Co
                                + 4 * M_pad * H + 3 * M_pad * Co,
                                4 * (M_pad * C + H * C + Co * H + H + 2 * N * Co)),
        )(x_p, w1s, sh1, a1s, w2)

    s2 = jnp.sum(sum2, axis=0)                               # (Co, 1)
    q2 = jnp.sum(ssq2, axis=0)
    if L_pad != L:
        # Zero-padded x columns produce the constant y_pad = W2 @ PReLU(sh1);
        # subtract their exact contribution so BN2 stats match the true batch.
        n_pad = jnp.float32(N * (L_pad - L))
        h_pad = jnp.where(sh1 > 0, sh1, jnp.asarray(a1, jnp.float32) * sh1)
        y_pad = jnp.dot(w2, h_pad)                           # (Co, 1)
        s2 = s2 - n_pad * y_pad
        q2 = q2 - n_pad * (y_pad * y_pad)
    mean2 = s2 / M
    var2 = jnp.maximum(q2 / M - mean2 * mean2, 0.0)
    sc2 = g2.reshape(Co, 1) * lax.rsqrt(var2 + BN_EPS)
    sh2 = be2.reshape(Co, 1) - mean2 * sc2
    w2s = sc2 * w2                                           # fold BN2 scale into conv2

    # ---- pass 3: full block + residual add, lane-dense output ----
    out_p = pl.pallas_call(
        _final_kernel,
        grid=grid,
        in_specs=[x_spec, w1_spec, ch_h_spec, smem_spec,
                  w2_spec, ch_c_spec, smem_spec],
        out_specs=o_spec,
        out_shape=jax.ShapeDtypeStruct((N, Co, L_pad), x_ncl.dtype),
        compiler_params=cparams_final,
        cost_estimate=_cost(2 * M_pad * C * H + 2 * M_pad * H * Co
                            + 4 * M_pad * H + 5 * M_pad * Co,
                            4 * (2 * M_pad * C + H * C + Co * H + H + Co)),
    )(x_p, w1s, sh1, a1s, w2s, sh2, a2s)

    return out_p if L_pad == L else out_p[:, :, :L]


# ----------------------------- reference -----------------------------------


def _reference(x_ncl, params):
    """Pure-JAX reference mirroring PyTorch training-mode semantics exactly."""
    (w1, b1, g1, be1, a1, w2, b2, g2, be2, a2) = params
    N, C, L = x_ncl.shape
    x2d = jnp.transpose(x_ncl, (0, 2, 1)).reshape(N * L, C)

    def bn(h, g, be):
        m = jnp.mean(h, axis=0, keepdims=True)
        v = jnp.mean((h - m) ** 2, axis=0, keepdims=True)
        return (h - m) / jnp.sqrt(v + BN_EPS) * g + be

    def prelu(h, a):
        return jnp.where(h > 0, h, a * h)

    h = x2d @ w1.T + b1
    h = prelu(bn(h, g1, be1), a1)
    y = h @ w2.T + b2
    y = prelu(bn(y, g2, be2), a2)
    out = x2d + y
    return out.reshape(N, L, C).transpose(0, 2, 1)


def init_params(key, in_dim, out_dim, res_h_dim):
    k1, k2, k3, k4 = jax.random.split(key, 4)
    # Conv1d kernel_size=1 weights: (out_ch, in_ch), stored without the k=1 dim.
    w1 = 0.1 * jax.random.normal(k1, (res_h_dim, in_dim), jnp.float32)
    b1 = 0.1 * jax.random.normal(k2, (res_h_dim,), jnp.float32)
    w2 = 0.1 * jax.random.normal(k3, (out_dim, res_h_dim), jnp.float32)
    b2 = 0.1 * jax.random.normal(k4, (out_dim,), jnp.float32)
    # BatchNorm affine params (PyTorch default init: gamma=1, beta=0).
    g1 = jnp.ones((res_h_dim,), jnp.float32)
    be1 = jnp.zeros((res_h_dim,), jnp.float32)
    g2 = jnp.ones((out_dim,), jnp.float32)
    be2 = jnp.zeros((out_dim,), jnp.float32)
    # PReLU single shared parameter (PyTorch default init 0.25).
    a1 = jnp.array(0.25, jnp.float32)
    a2 = jnp.array(0.25, jnp.float32)
    return (w1, b1, g1, be1, a1, w2, b2, g2, be2, a2)


if __name__ == "__main__":
    key = jax.random.PRNGKey(0)

    # Test 1: module-spec-sized shapes (recompute-conv1 path, padded L).
    N, C, H, L = 2, 4, 8, 16
    kx, kp, key = jax.random.split(key, 3)
    x = jax.random.normal(kx, (N, C, L), jnp.float32)
    params = init_params(kp, C, C, H)
    out = jax.block_until_ready(residual_layer(x, params))
    ref = _reference(x, params)
    assert out.shape == x.shape and out.dtype == x.dtype
    assert jnp.allclose(out, ref, atol=1e-4, rtol=1e-4), "mismatch (recompute path)"

    # Test 2: 2H < C -> write-h dataflow; L not a multiple of 128 (pad + correction).
    N2, C2, H2, L2 = 2, 32, 8, 200
    kx2, kp2 = jax.random.split(key)
    x2 = jax.random.normal(kx2, (N2, C2, L2), jnp.float32)
    params2 = init_params(kp2, C2, C2, H2)
    out2 = jax.block_until_ready(residual_layer(x2, params2))
    ref2 = _reference(x2, params2)
    assert out2.shape == x2.shape and out2.dtype == x2.dtype
    assert jnp.allclose(out2, ref2, atol=1e-4, rtol=1e-4), "mismatch (write-h path)"

    print("KERNEL_OK")
</pallas_src>

<mosaic_0001>
module attributes {stable_mosaic.version = 11 : i64} {
  func.func @_stats1_kernel(%arg0: i32, %arg1: i32, %arg2: memref<1x4x128xf32, #tpu.memory_space<vmem>>, %arg3: memref<8x4xf32, #tpu.memory_space<vmem>>, %arg4: memref<1x8x1xf32, #tpu.memory_space<vmem>>, %arg5: memref<1x8x1xf32, #tpu.memory_space<vmem>>) attributes {dimension_semantics = [#tpu.dimension_semantics<parallel>, #tpu.dimension_semantics<arbitrary>], iteration_bounds = array<i64: 2, 1>, scalar_prefetch = 0 : i64, scratch_operands = 0 : i64, tpu.core_type = #tpu.core_type<tc>, window_params = [{transform_indices = @transform_0, window_bounds = array<i64: 1, 4, 128>}, {pipeline_mode = #tpu.pipeline_mode<synchronous>, transform_indices = @transform_1, window_bounds = array<i64: 8, 4>}, {transform_indices = @transform_2, window_bounds = array<i64: 1, 8, 1>}, {transform_indices = @transform_3, window_bounds = array<i64: 1, 8, 1>}]} {
    %c0_i32 = arith.constant 0 : i32
    %0 = arith.cmpi eq, %arg1, %c0_i32 : i32
    %1 = arith.extui %0 : i1 to i32
    %c0_i32_0 = arith.constant 0 : i32
    %2 = arith.cmpi ne, %1, %c0_i32_0 : i32
    scf.if %2 {
      %cst_19 = arith.constant 0.000000e+00 : f32
      %24 = vector.broadcast %cst_19 : f32 to vector<1x8x1xf32>
      %c0_20 = arith.constant 0 : index
      %c0_21 = arith.constant 0 : index
      %c0_22 = arith.constant 0 : index
      %25 = vector.load %arg4[%c0_20, %c0_21, %c0_22] : memref<1x8x1xf32, #tpu.memory_space<vmem>>, vector<1x8x1xf32>
      tpu.vector_store %arg4[%c0_20, %c0_21, %c0_22], %24 {strides = array<i32>} : memref<1x8x1xf32, #tpu.memory_space<vmem>>, vector<1x8x1xf32>,
      %cst_23 = arith.constant 0.000000e+00 : f32
      %26 = vector.broadcast %cst_23 : f32 to vector<1x8x1xf32>
      %c0_24 = arith.constant 0 : index
      %c0_25 = arith.constant 0 : index
      %c0_26 = arith.constant 0 : index
      %27 = vector.load %arg5[%c0_24, %c0_25, %c0_26] : memref<1x8x1xf32, #tpu.memory_space<vmem>>, vector<1x8x1xf32>
      tpu.vector_store %arg5[%c0_24, %c0_25, %c0_26], %26 {strides = array<i32>} : memref<1x8x1xf32, #tpu.memory_space<vmem>>, vector<1x8x1xf32>,
    } else {
    }
    %c0 = arith.constant 0 : index
    %c0_1 = arith.constant 0 : index
    %3 = vector.load %arg3[%c0, %c0_1] : memref<8x4xf32, #tpu.memory_space<vmem>>, vector<8x4xf32>
    %c0_2 = arith.constant 0 : index
    %c0_3 = arith.constant 0 : index
    %c0_4 = arith.constant 0 : index
    %4 = vector.load %arg2[%c0_2, %c0_3, %c0_4] : memref<1x4x128xf32, #tpu.memory_space<vmem>>, vector<1x4x128xf32>
    %5 = vector.shape_cast %4 : vector<1x4x128xf32> to vector<4x128xf32>
    %cst = arith.constant dense<0.000000e+00> : vector<8x128xf32>
    %6 = tpu.matmul %3, %5, %cst {dimension_numbers = #tpu.dot_dimension_numbers<[1], [0], [0], [1], [0, 0, 1, 1], [], []>} : vector<8x4xf32>, vector<4x128xf32>, vector<8x128xf32> -> vector<8x128xf32>
    %c0_5 = arith.constant 0 : index
    %c0_6 = arith.constant 0 : index
    %c0_7 = arith.constant 0 : index
    %7 = vector.load %arg4[%c0_5, %c0_6, %c0_7] : memref<1x8x1xf32, #tpu.memory_space<vmem>>, vector<1x8x1xf32>
    %8 = vector.shape_cast %7 : vector<1x8x1xf32> to vector<8x1xf32>
    %cst_8 = arith.constant dense<0.000000e+00> : vector<8xf32>
    %9 = vector.multi_reduction <add>, %6, %cst_8 [1] : vector<8x128xf32> to vector<8xf32>
    %10 = vector.shape_cast %9 : vector<8xf32> to vector<8x1xf32>
    %11 = arith.addf %8, %10 : vector<8x1xf32>
    %c0_9 = arith.constant 0 : index
    %c0_10 = arith.constant 0 : index
    %c0_11 = arith.constant 0 : index
    %12 = vector.load %arg4[%c0_9, %c0_10, %c0_11] : memref<1x8x1xf32, #tpu.memory_space<vmem>>, vector<1x8x1xf32>
    %13 = vector.shape_cast %12 : vector<1x8x1xf32> to vector<8x1xf32>
    %14 = vector.shape_cast %11 : vector<8x1xf32> to vector<1x8x1xf32>
    tpu.vector_store %arg4[%c0_9, %c0_10, %c0_11], %14 {strides = array<i32>} : memref<1x8x1xf32, #tpu.memory_space<vmem>>, vector<1x8x1xf32>,
    %c0_12 = arith.constant 0 : index
    %c0_13 = arith.constant 0 : index
    %c0_14 = arith.constant 0 : index
    %15 = vector.load %arg5[%c0_12, %c0_13, %c0_14] : memref<1x8x1xf32, #tpu.memory_space<vmem>>, vector<1x8x1xf32>
    %16 = vector.shape_cast %15 : vector<1x8x1xf32> to vector<8x1xf32>
    %17 = arith.mulf %6, %6 : vector<8x128xf32>
    %cst_15 = arith.constant dense<0.000000e+00> : vector<8xf32>
    %18 = vector.multi_reduction <add>, %17, %cst_15 [1] : vector<8x128xf32> to vector<8xf32>
    %19 = vector.shape_cast %18 : vector<8xf32> to vector<8x1xf32>
    %20 = arith.addf %16, %19 : vector<8x1xf32>
    %c0_16 = arith.constant 0 : index
    %c0_17 = arith.constant 0 : index
    %c0_18 = arith.constant 0 : index
    %21 = vector.load %arg5[%c0_16, %c0_17, %c0_18] : memref<1x8x1xf32, #tpu.memory_space<vmem>>, vector<1x8x1xf32>
    %22 = vector.shape_cast %21 : vector<1x8x1xf32> to vector<8x1xf32>
    %23 = vector.shape_cast %20 : vector<8x1xf32> to vector<1x8x1xf32>
    tpu.vector_store %arg5[%c0_16, %c0_17, %c0_18], %23 {strides = array<i32>} : memref<1x8x1xf32, #tpu.memory_space<vmem>>, vector<1x8x1xf32>,
    return
  }
  func.func @transform_0(%arg0: i32, %arg1: i32) -> (i32, i32, i32) {
    %c0_i32 = arith.constant 0 : i32
    %c0_i32_0 = arith.constant 0 : i32
    return %arg0, %c0_i32, %arg1 : i32, i32, i32
  }
  func.func @transform_1(%arg0: i32, %arg1: i32) -> (i32, i32) {
    %c0_i32 = arith.constant 0 : i32
    %c0_i32_0 = arith.constant 0 : i32
    %c0_i32_1 = arith.constant 0 : i32
    return %c0_i32, %c0_i32_0 : i32, i32
  }
  func.func @transform_2(%arg0: i32, %arg1: i32) -> (i32, i32, i32) {
    %c0_i32 = arith.constant 0 : i32
    %c0_i32_0 = arith.constant 0 : i32
    %c0_i32_1 = arith.constant 0 : i32
    return %arg0, %c0_i32, %c0_i32_0 : i32, i32, i32
  }
  func.func @transform_3(%arg0: i32, %arg1: i32) -> (i32, i32, i32) {
    %c0_i32 = arith.constant 0 : i32
    %c0_i32_0 = arith.constant 0 : i32
    %c0_i32_1 = arith.constant 0 : i32
    return %arg0, %c0_i32, %c0_i32_0 : i32, i32, i32
  }
}

module attributes {stable_mosaic.version = 11 : i64} {
  func.func @_stats2_from_x_kernel(%arg0: i32, %arg1: i32, %arg2: memref<1x4x128xf32, #tpu.memory_space<vmem>>, %arg3: memref<8x4xf32, #tpu.memory_space<vmem>>, %arg4: memref<8x1xf32, #tpu.memory_space<vmem>>, %arg5: memref<1x1xf32, #tpu.memory_space<smem>>, %arg6: memref<4x8xf32, #tpu.memory_space<vmem>>, %arg7: memref<1x4x1xf32, #tpu.memory_space<vmem>>, %arg8: memref<1x4x1xf32, #tpu.memory_space<vmem>>) attributes {dimension_semantics = [#tpu.dimension_semantics<parallel>, #tpu.dimension_semantics<arbitrary>], iteration_bounds = array<i64: 2, 1>, scalar_prefetch = 0 : i64, scratch_operands = 0 : i64, tpu.core_type = #tpu.core_type<tc>, window_params = [{transform_indices = @transform_0, window_bounds = array<i64: 1, 4, 128>}, {pipeline_mode = #tpu.pipeline_mode<synchronous>, transform_indices = @transform_1, window_bounds = array<i64: 8, 4>}, {pipeline_mode = #tpu.pipeline_mode<synchronous>, transform_indices = @transform_2, window_bounds = array<i64: 8, 1>}, {transform_indices = @transform_3, window_bounds = array<i64: 1, 1>}, {pipeline_mode = #tpu.pipeline_mode<synchronous>, transform_indices = @transform_4, window_bounds = array<i64: 4, 8>}, {transform_indices = @transform_5, window_bounds = array<i64: 1, 4, 1>}, {transform_indices = @transform_6, window_bounds = array<i64: 1, 4, 1>}]} {
    %c0_i32 = arith.constant 0 : i32
    %0 = arith.cmpi eq, %arg1, %c0_i32 : i32
    %1 = arith.extui %0 : i1 to i32
    %c0_i32_0 = arith.constant 0 : i32
    %2 = arith.cmpi ne, %1, %c0_i32_0 : i32
    scf.if %2 {
      %cst_27 = arith.constant 0.000000e+00 : f32
      %35 = vector.broadcast %cst_27 : f32 to vector<1x4x1xf32>
      %c0_28 = arith.constant 0 : index
      %c0_29 = arith.constant 0 : index
      %c0_30 = arith.constant 0 : index
      %36 = vector.load %arg7[%c0_28, %c0_29, %c0_30] : memref<1x4x1xf32, #tpu.memory_space<vmem>>, vector<1x4x1xf32>
      tpu.vector_store %arg7[%c0_28, %c0_29, %c0_30], %35 {strides = array<i32>} : memref<1x4x1xf32, #tpu.memory_space<vmem>>, vector<1x4x1xf32>,
      %cst_31 = arith.constant 0.000000e+00 : f32
      %37 = vector.broadcast %cst_31 : f32 to vector<1x4x1xf32>
      %c0_32 = arith.constant 0 : index
      %c0_33 = arith.constant 0 : index
      %c0_34 = arith.constant 0 : index
      %38 = vector.load %arg8[%c0_32, %c0_33, %c0_34] : memref<1x4x1xf32, #tpu.memory_space<vmem>>, vector<1x4x1xf32>
      tpu.vector_store %arg8[%c0_32, %c0_33, %c0_34], %37 {strides = array<i32>} : memref<1x4x1xf32, #tpu.memory_space<vmem>>, vector<1x4x1xf32>,
    } else {
    }
    %c0 = arith.constant 0 : index
    %c0_1 = arith.constant 0 : index
    %3 = vector.load %arg3[%c0, %c0_1] : memref<8x4xf32, #tpu.memory_space<vmem>>, vector<8x4xf32>
    %c0_2 = arith.constant 0 : index
    %c0_3 = arith.constant 0 : index
    %c0_4 = arith.constant 0 : index
    %4 = vector.load %arg2[%c0_2, %c0_3, %c0_4] : memref<1x4x128xf32, #tpu.memory_space<vmem>>, vector<1x4x128xf32>
    %5 = vector.shape_cast %4 : vector<1x4x128xf32> to vector<4x128xf32>
    %cst = arith.constant dense<0.000000e+00> : vector<8x128xf32>
    %6 = tpu.matmul %3, %5, %cst {dimension_numbers = #tpu.dot_dimension_numbers<[1], [0], [0], [1], [0, 0, 1, 1], [], []>} : vector<8x4xf32>, vector<4x128xf32>, vector<8x128xf32> -> vector<8x128xf32>
    %c0_5 = arith.constant 0 : index
    %c0_6 = arith.constant 0 : index
    %7 = vector.load %arg4[%c0_5, %c0_6] : memref<8x1xf32, #tpu.memory_space<vmem>>, vector<8x1xf32>
    %8 = vector.broadcast %7 : vector<8x1xf32> to vector<8x128xf32>
    %9 = arith.addf %6, %8 : vector<8x128xf32>
    %c0_7 = arith.constant 0 : index
    %c0_8 = arith.constant 0 : index
    %10 = memref.load %arg5[%c0_7, %c0_8] : memref<1x1xf32, #tpu.memory_space<smem>>
    %cst_9 = arith.constant 0.000000e+00 : f32
    %11 = vector.broadcast %cst_9 : f32 to vector<8x128xf32>
    %12 = arith.cmpf ogt, %9, %11 : vector<8x128xf32>
    %13 = vector.broadcast %10 : f32 to vector<8x128xf32>
    %14 = arith.mulf %13, %9 : vector<8x128xf32>
    %15 = arith.select %12, %9, %14 : vector<8x128xi1>, vector<8x128xf32>
    %c0_10 = arith.constant 0 : index
    %c0_11 = arith.constant 0 : index
    %16 = vector.load %arg6[%c0_10, %c0_11] : memref<4x8xf32, #tpu.memory_space<vmem>>, vector<4x8xf32>
    %cst_12 = arith.constant dense<0.000000e+00> : vector<4x128xf32>
    %17 = tpu.matmul %16, %15, %cst_12 {dimension_numbers = #tpu.dot_dimension_numbers<[1], [0], [0], [1], [0, 0, 1, 1], [], []>} : vector<4x8xf32>, vector<8x128xf32>, vector<4x128xf32> -> vector<4x128xf32>
    %c0_13 = arith.constant 0 : index
    %c0_14 = arith.constant 0 : index
    %c0_15 = arith.constant 0 : index
    %18 = vector.load %arg7[%c0_13, %c0_14, %c0_15] : memref<1x4x1xf32, #tpu.memory_space<vmem>>, vector<1x4x1xf32>
    %19 = vector.shape_cast %18 : vector<1x4x1xf32> to vector<4x1xf32>
    %cst_16 = arith.constant dense<0.000000e+00> : vector<4xf32>
    %20 = vector.multi_reduction <add>, %17, %cst_16 [1] : vector<4x128xf32> to vector<4xf32>
    %21 = vector.shape_cast %20 : vector<4xf32> to vector<4x1xf32>
    %22 = arith.addf %19, %21 : vector<4x1xf32>
    %c0_17 = arith.constant 0 : index
    %c0_18 = arith.constant 0 : index
    %c0_19 = arith.constant 0 : index
    %23 = vector.load %arg7[%c0_17, %c0_18, %c0_19] : memref<1x4x1xf32, #tpu.memory_space<vmem>>, vector<1x4x1xf32>
    %24 = vector.shape_cast %23 : vector<1x4x1xf32> to vector<4x1xf32>
    %25 = vector.shape_cast %22 : vector<4x1xf32> to vector<1x4x1xf32>
    tpu.vector_store %arg7[%c0_17, %c0_18, %c0_19], %25 {strides = array<i32>} : memref<1x4x1xf32, #tpu.memory_space<vmem>>, vector<1x4x1xf32>,
    %c0_20 = arith.constant 0 : index
    %c0_21 = arith.constant 0 : index
    %c0_22 = arith.constant 0 : index
    %26 = vector.load %arg8[%c0_20, %c0_21, %c0_22] : memref<1x4x1xf32, #tpu.memory_space<vmem>>, vector<1x4x1xf32>
    %27 = vector.shape_cast %26 : vector<1x4x1xf32> to vector<4x1xf32>
    %28 = arith.mulf %17, %17 : vector<4x128xf32>
    %cst_23 = arith.constant dense<0.000000e+00> : vector<4xf32>
    %29 = vector.multi_reduction <add>, %28, %cst_23 [1] : vector<4x128xf32> to vector<4xf32>
    %30 = vector.shape_cast %29 : vector<4xf32> to vector<4x1xf32>
    %31 = arith.addf %27, %30 : vector<4x1xf32>
    %c0_24 = arith.constant 0 : index
    %c0_25 = arith.constant 0 : index
    %c0_26 = arith.constant 0 : index
    %32 = vector.load %arg8[%c0_24, %c0_25, %c0_26] : memref<1x4x1xf32, #tpu.memory_space<vmem>>, vector<1x4x1xf32>
    %33 = vector.shape_cast %32 : vector<1x4x1xf32> to vector<4x1xf32>
    %34 = vector.shape_cast %31 : vector<4x1xf32> to vector<1x4x1xf32>
    tpu.vector_store %arg8[%c0_24, %c0_25, %c0_26], %34 {strides = array<i32>} : memref<1x4x1xf32, #tpu.memory_space<vmem>>, vector<1x4x1xf32>,
    return
  }
  func.func @transform_0(%arg0: i32, %arg1: i32) -> (i32, i32, i32) {
    %c0_i32 = arith.constant 0 : i32
    %c0_i32_0 = arith.constant 0 : i32
    return %arg0, %c0_i32, %arg1 : i32, i32, i32
  }
  func.func @transform_1(%arg0: i32, %arg1: i32) -> (i32, i32) {
    %c0_i32 = arith.constant 0 : i32
    %c0_i32_0 = arith.constant 0 : i32
    %c0_i32_1 = arith.constant 0 : i32
    return %c0_i32, %c0_i32_0 : i32, i32
  }
  func.func @transform_2(%arg0: i32, %arg1: i32) -> (i32, i32) {
    %c0_i32 = arith.constant 0 : i32
    %c0_i32_0 = arith.constant 0 : i32
    %c0_i32_1 = arith.constant 0 : i32
    return %c0_i32, %c0_i32_0 : i32, i32
  }
  func.func @transform_3(%arg0: i32, %arg1: i32) -> (i32, i32) {
    %c0_i32 = arith.constant 0 : i32
    %c0_i32_0 = arith.constant 0 : i32
    %c0_i32_1 = arith.constant 0 : i32
    return %c0_i32, %c0_i32_0 : i32, i32
  }
  func.func @transform_4(%arg0: i32, %arg1: i32) -> (i32, i32) {
    %c0_i32 = arith.constant 0 : i32
    %c0_i32_0 = arith.constant 0 : i32
    %c0_i32_1 = arith.constant 0 : i32
    return %c0_i32, %c0_i32_0 : i32, i32
  }
  func.func @transform_5(%arg0: i32, %arg1: i32) -> (i32, i32, i32) {
    %c0_i32 = arith.constant 0 : i32
    %c0_i32_0 = arith.constant 0 : i32
    %c0_i32_1 = arith.constant 0 : i32
    return %arg0, %c0_i32, %c0_i32_0 : i32, i32, i32
  }
  func.func @transform_6(%arg0: i32, %arg1: i32) -> (i32, i32, i32) {
    %c0_i32 = arith.constant 0 : i32
    %c0_i32_0 = arith.constant 0 : i32
    %c0_i32_1 = arith.constant 0 : i32
    return %arg0, %c0_i32, %c0_i32_0 : i32, i32, i32
  }
}

module attributes {stable_mosaic.version = 11 : i64} {
  func.func @_final_kernel(%arg0: i32, %arg1: i32, %arg2: memref<1x4x128xf32, #tpu.memory_space<vmem>>, %arg3: memref<8x4xf32, #tpu.memory_space<vmem>>, %arg4: memref<8x1xf32, #tpu.memory_space<vmem>>, %arg5: memref<1x1xf32, #tpu.memory_space<smem>>, %arg6: memref<4x8xf32, #tpu.memory_space<vmem>>, %arg7: memref<4x1xf32, #tpu.memory_space<vmem>>, %arg8: memref<1x1xf32, #tpu.memory_space<smem>>, %arg9: memref<1x4x128xf32, #tpu.memory_space<vmem>>) attributes {dimension_semantics = [#tpu.dimension_semantics<parallel>, #tpu.dimension_semantics<parallel>], iteration_bounds = array<i64: 2, 1>, scalar_prefetch = 0 : i64, scratch_operands = 0 : i64, tpu.core_type = #tpu.core_type<tc>, window_params = [{transform_indices = @transform_0, window_bounds = array<i64: 1, 4, 128>}, {pipeline_mode = #tpu.pipeline_mode<synchronous>, transform_indices = @transform_1, window_bounds = array<i64: 8, 4>}, {pipeline_mode = #tpu.pipeline_mode<synchronous>, transform_indices = @transform_2, window_bounds = array<i64: 8, 1>}, {transform_indices = @transform_3, window_bounds = array<i64: 1, 1>}, {pipeline_mode = #tpu.pipeline_mode<synchronous>, transform_indices = @transform_4, window_bounds = array<i64: 4, 8>}, {pipeline_mode = #tpu.pipeline_mode<synchronous>, transform_indices = @transform_5, window_bounds = array<i64: 4, 1>}, {transform_indices = @transform_6, window_bounds = array<i64: 1, 1>}, {transform_indices = @transform_7, window_bounds = array<i64: 1, 4, 128>}]} {
    %c0 = arith.constant 0 : index
    %c0_0 = arith.constant 0 : index
    %c0_1 = arith.constant 0 : index
    %0 = vector.load %arg2[%c0, %c0_0, %c0_1] : memref<1x4x128xf32, #tpu.memory_space<vmem>>, vector<1x4x128xf32>
    %1 = vector.shape_cast %0 : vector<1x4x128xf32> to vector<4x128xf32>
    %c0_2 = arith.constant 0 : index
    %c0_3 = arith.constant 0 : index
    %2 = vector.load %arg3[%c0_2, %c0_3] : memref<8x4xf32, #tpu.memory_space<vmem>>, vector<8x4xf32>
    %cst = arith.constant dense<0.000000e+00> : vector<8x128xf32>
    %3 = tpu.matmul %2, %1, %cst {dimension_numbers = #tpu.dot_dimension_numbers<[1], [0], [0], [1], [0, 0, 1, 1], [], []>} : vector<8x4xf32>, vector<4x128xf32>, vector<8x128xf32> -> vector<8x128xf32>
    %c0_4 = arith.constant 0 : index
    %c0_5 = arith.constant 0 : index
    %4 = vector.load %arg4[%c0_4, %c0_5] : memref<8x1xf32, #tpu.memory_space<vmem>>, vector<8x1xf32>
    %5 = vector.broadcast %4 : vector<8x1xf32> to vector<8x128xf32>
    %6 = arith.addf %3, %5 : vector<8x128xf32>
    %c0_6 = arith.constant 0 : index
    %c0_7 = arith.constant 0 : index
    %7 = memref.load %arg5[%c0_6, %c0_7] : memref<1x1xf32, #tpu.memory_space<smem>>
    %cst_8 = arith.constant 0.000000e+00 : f32
    %8 = vector.broadcast %cst_8 : f32 to vector<8x128xf32>
    %9 = arith.cmpf ogt, %6, %8 : vector<8x128xf32>
    %10 = vector.broadcast %7 : f32 to vector<8x128xf32>
    %11 = arith.mulf %10, %6 : vector<8x128xf32>
    %12 = arith.select %9, %6, %11 : vector<8x128xi1>, vector<8x128xf32>
    %c0_9 = arith.constant 0 : index
    %c0_10 = arith.constant 0 : index
    %13 = vector.load %arg6[%c0_9, %c0_10] : memref<4x8xf32, #tpu.memory_space<vmem>>, vector<4x8xf32>
    %cst_11 = arith.constant dense<0.000000e+00> : vector<4x128xf32>
    %14 = tpu.matmul %13, %12, %cst_11 {dimension_numbers = #tpu.dot_dimension_numbers<[1], [0], [0], [1], [0, 0, 1, 1], [], []>} : vector<4x8xf32>, vector<8x128xf32>, vector<4x128xf32> -> vector<4x128xf32>
    %c0_12 = arith.constant 0 : index
    %c0_13 = arith.constant 0 : index
    %15 = vector.load %arg7[%c0_12, %c0_13] : memref<4x1xf32, #tpu.memory_space<vmem>>, vector<4x1xf32>
    %16 = vector.broadcast %15 : vector<4x1xf32> to vector<4x128xf32>
    %17 = arith.addf %14, %16 : vector<4x128xf32>
    %c0_14 = arith.constant 0 : index
    %c0_15 = arith.constant 0 : index
    %18 = memref.load %arg8[%c0_14, %c0_15] : memref<1x1xf32, #tpu.memory_space<smem>>
    %cst_16 = arith.constant 0.000000e+00 : f32
    %19 = vector.broadcast %cst_16 : f32 to vector<4x128xf32>
    %20 = arith.cmpf ogt, %17, %19 : vector<4x128xf32>
    %21 = vector.broadcast %18 : f32 to vector<4x128xf32>
    %22 = arith.mulf %21, %17 : vector<4x128xf32>
    %23 = arith.select %20, %17, %22 : vector<4x128xi1>, vector<4x128xf32>
    %24 = arith.addf %1, %23 : vector<4x128xf32>
    %c0_17 = arith.constant 0 : index
    %c0_18 = arith.constant 0 : index
    %c0_19 = arith.constant 0 : index
    %25 = vector.load %arg9[%c0_17, %c0_18, %c0_19] : memref<1x4x128xf32, #tpu.memory_space<vmem>>, vector<1x4x128xf32>
    %26 = vector.shape_cast %25 : vector<1x4x128xf32> to vector<4x128xf32>
    %27 = vector.shape_cast %24 : vector<4x128xf32> to vector<1x4x128xf32>
    tpu.vector_store %arg9[%c0_17, %c0_18, %c0_19], %27 {strides = array<i32>} : memref<1x4x128xf32, #tpu.memory_space<vmem>>, vector<1x4x128xf32>,
    return
  }
  func.func @transform_0(%arg0: i32, %arg1: i32) -> (i32, i32, i32) {
    %c0_i32 = arith.constant 0 : i32
    %c0_i32_0 = arith.constant 0 : i32
    return %arg0, %c0_i32, %arg1 : i32, i32, i32
  }
  func.func @transform_1(%arg0: i32, %arg1: i32) -> (i32, i32) {
    %c0_i32 = arith.constant 0 : i32
    %c0_i32_0 = arith.constant 0 : i32
    %c0_i32_1 = arith.constant 0 : i32
    return %c0_i32, %c0_i32_0 : i32, i32
  }
  func.func @transform_2(%arg0: i32, %arg1: i32) -> (i32, i32) {
    %c0_i32 = arith.constant 0 : i32
    %c0_i32_0 = arith.constant 0 : i32
    %c0_i32_1 = arith.constant 0 : i32
    return %c0_i32, %c0_i32_0 : i32, i32
  }
  func.func @transform_3(%arg0: i32, %arg1: i32) -> (i32, i32) {
    %c0_i32 = arith.constant 0 : i32
    %c0_i32_0 = arith.constant 0 : i32
    %c0_i32_1 = arith.constant 0 : i32
    return %c0_i32, %c0_i32_0 : i32, i32
  }
  func.func @transform_4(%arg0: i32, %arg1: i32) -> (i32, i32) {
    %c0_i32 = arith.constant 0 : i32
    %c0_i32_0 = arith.constant 0 : i32
    %c0_i32_1 = arith.constant 0 : i32
    return %c0_i32, %c0_i32_0 : i32, i32
  }
  func.func @transform_5(%arg0: i32, %arg1: i32) -> (i32, i32) {
    %c0_i32 = arith.constant 0 : i32
    %c0_i32_0 = arith.constant 0 : i32
    %c0_i32_1 = arith.constant 0 : i32
    return %c0_i32, %c0_i32_0 : i32, i32
  }
  func.func @transform_6(%arg0: i32, %arg1: i32) -> (i32, i32) {
    %c0_i32 = arith.constant 0 : i32
    %c0_i32_0 = arith.constant 0 : i32
    %c0_i32_1 = arith.constant 0 : i32
    return %c0_i32, %c0_i32_0 : i32, i32
  }
  func.func @transform_7(%arg0: i32, %arg1: i32) -> (i32, i32, i32) {
    %c0_i32 = arith.constant 0 : i32
    %c0_i32_0 = arith.constant 0 : i32
    return %arg0, %c0_i32, %arg1 : i32, i32, i32
  }
}

</mosaic_0001>

<llo_original>
// kernel: residual_layer.3
$region0: #{residual_layer.3}
  #allocation0 [shape = 'u32[]', space=smem, size = 0x4, offset = 0x4, fixed_abs, tag = 'smem constant byte address 0x4 - core index']
  #allocation1 [shape = 'u32[72,128]{1,0:T(1,128)}', space=vmem, size = 0x9000, scoped, tag = 'internal scratch']
  %s0 = inlined_call_operand.vmem [shape: f32[2,4,128], index: 0, kind: input, shape index: {}]
  %s1 = inlined_call_operand.vmem [shape: f32[8,4], index: 1, kind: input, shape index: {}]
  %s2 = inlined_call_operand.vmem [shape: f32[2,8,1], index: 2, kind: output, shape index: {0}]
  %s3 = inlined_call_operand.vmem [shape: f32[2,8,1], index: 3, kind: output, shape index: {1}]
  %4 = xla_tuple %s2, %s3
  %s5 = sld [smem:[#allocation0]]
  $region53: #{residual_layer.3} parent=0
    _
  %s7 = ssub.s32 1, %s5
  %s8 = scalar_select 0, %s7, %s5
  loop: start=0, step=1, limit=4
  $region2: #{residual_layer.3} parent=0 // loop_pre_header
    _
  $region3: #{residual_layer.3} parent=0 // loop_header
    %s10 = sphi 0, %s14
    %p11 = scmp.ge.s32.totalorder %s10, 4
    %s17 = sphi 0, %s29
    %s18 = sphi 0, %s25
    %s19 = sphi 0, %s17
    %s20 = sphi 0, %s18
    %s21 = sphi 0, %s19
    %s22 = sphi 0, %s20
    %s34 = sphi 0, %s36
    %s37 = sphi 0, %s34
    %s38 = sphi 0, %s37
    %s54 = sphi 0, %s38
    %s58 = sphi 0, %s58
    %s60 = sphi 0, %s58
    %s61 = sphi 0, %s60
    %s75 = sphi 0, %s61
    %s81 = sphi 0, %s83
    %s84 = sphi 0, %s81
    %s85 = sphi 0, %s84
    %s101 = sphi 0, %s85
    %s107 = sphi 0, %s109
    %s110 = sphi 0, %s107
    %s111 = sphi 0, %s110
    %s127 = sphi 0, %s111
  $region4: #{residual_layer.3} parent=0 // loop_header_branch
    %13 = sbr.rel (%p11) target = $region8
  $region5: #{residual_layer.3} parent=0 // loop_body
    %s15 = ssub.s32 %s10, 1
    %s16 = ssub.s32 %s10, 2
    %s23 = sadd.s32 1, %s18
    %p24 = scmp.ge.s32.totalorder %s23, 1
    %s25 = scalar_select %p24, 0, %s23
    %s26 = sadd.s32 1, %s17
    %s27 = scalar_select %p24, %s26, %s17
    %p28 = scmp.ge.s32.totalorder %s27, 2
    %s29 = scalar_select %p28, 0, %s27
    %s30 = ssub.s32 %s17, %s29
    %s31 = ssub.s32 %s18, %s25
    %s32 = sor.u32 %s30, %s31
    %p33 = scmp.eq.s32.totalorder %s32, 0
    %s35 = sadd.s32 %s34, 1
    %s36 = scalar_select %p33, %s34, %s35
    %p39 = pneg %p33
    %p40 = scmp.eq.s32.totalorder %s10, 1
    %p41 = por %p39, %p40
    %p42 = scmp.ne.s32.totalorder %s34, %s37
    %p43 = scmp.eq.s32.totalorder %s10, 0
    %p44 = por %p42, %p43
    %p45 = scmp.ne.s32.totalorder %s34, %s37
    %p46 = scmp.eq.s32.totalorder %s15, 1
    %p47 = por %p45, %p46
    %p48 = scmp.ne.s32.totalorder %s37, %s38
    %p49 = scmp.eq.s32.totalorder %s15, 0
    %p50 = por %p48, %p49
    %p51 = scmp.ne.s32.totalorder %s37, %s38
    %p52 = scmp.eq.s32.totalorder %s16, 1
    %p53 = por %p51, %p52
    %p55 = scmp.ne.s32.totalorder %s38, %s54
    %p56 = scmp.eq.s32.totalorder %s16, 0
    %p57 = por %p55, %p56
    %s59 = sadd.s32 %s58, 1
    %p62 = scmp.eq.s32.totalorder %s10, 1
    %p63 = scmp.ne.s32.totalorder %s58, %s60
    %p64 = scmp.eq.s32.totalorder %s10, 0
    %p65 = por %p63, %p64
    %p66 = scmp.ne.s32.totalorder %s58, %s60
    %p67 = scmp.eq.s32.totalorder %s15, 1
    %p68 = por %p66, %p67
    %p69 = scmp.ne.s32.totalorder %s60, %s61
    %p70 = scmp.eq.s32.totalorder %s15, 0
    %p71 = por %p69, %p70
    %p72 = scmp.ne.s32.totalorder %s60, %s61
    %p73 = scmp.eq.s32.totalorder %s16, 1
    %p74 = por %p72, %p73
    %p76 = scmp.ne.s32.totalorder %s61, %s75
    %p77 = scmp.eq.s32.totalorder %s16, 0
    %p78 = por %p76, %p77
    %s79 = ssub.s32 %s17, %s29
    %p80 = scmp.eq.s32.totalorder %s79, 0
    %s82 = sadd.s32 %s81, 1
    %s83 = scalar_select %p80, %s81, %s82
    %p86 = pneg %p80
    %p87 = scmp.eq.s32.totalorder %s10, 1
    %p88 = por %p86, %p87
    %p89 = scmp.ne.s32.totalorder %s81, %s84
    %p90 = scmp.eq.s32.totalorder %s10, 0
    %p91 = por %p89, %p90
    %p92 = scmp.ne.s32.totalorder %s81, %s84
    %p93 = scmp.eq.s32.totalorder %s15, 1
    %p94 = por %p92, %p93
    %p95 = scmp.ne.s32.totalorder %s84, %s85
    %p96 = scmp.eq.s32.totalorder %s15, 0
    %p97 = por %p95, %p96
    %p98 = scmp.ne.s32.totalorder %s84, %s85
    %p99 = scmp.eq.s32.totalorder %s16, 1
    %p100 = por %p98, %p99
    %p102 = scmp.ne.s32.totalorder %s85, %s101
    %p103 = scmp.eq.s32.totalorder %s16, 0
    %p104 = por %p102, %p103
    %s105 = ssub.s32 %s17, %s29
    %p106 = scmp.eq.s32.totalorder %s105, 0
    %s108 = sadd.s32 %s107, 1
    %s109 = scalar_select %p106, %s107, %s108
    %p112 = pneg %p106
    %p113 = scmp.eq.s32.totalorder %s10, 1
    %p114 = por %p112, %p113
    %p115 = scmp.ne.s32.totalorder %s107, %s110
    %p116 = scmp.eq.s32.totalorder %s10, 0
    %p117 = por %p115, %p116
    %p118 = scmp.ne.s32.totalorder %s107, %s110
    %p119 = scmp.eq.s32.totalorder %s15, 1
    %p120 = por %p118, %p119
    %p121 = scmp.ne.s32.totalorder %s110, %s111
    %p122 = scmp.eq.s32.totalorder %s15, 0
    %p123 = por %p121, %p122
    %p124 = scmp.ne.s32.totalorder %s110, %s111
    %p125 = scmp.eq.s32.totalorder %s16, 1
    %p126 = por %p124, %p125
    %p128 = scmp.ne.s32.totalorder %s111, %s127
    %p129 = scmp.eq.s32.totalorder %s16, 0
    %p130 = por %p128, %p129
    %p131 = scmp.le.s32.totalorder 1, %s10
    %p132 = scmp.lt.s32.totalorder %s10, 3
    %p133 = pnand %p131, %p132
    %p134 = pneg %p133
    // Predicated region
    $region9: #{residual_layer.3} parent=5 // pred_check
      _
    $region10: #{residual_layer.3} parent=5 // pred_check_branch
      %136 = sbr.rel (%p133) target = $region12
    $region11: #{residual_layer.3} parent=5 // pred_region
      %s137 = ssub.s32 %s10, 1
      // Predicated region
      $region13: #{residual_layer.3} parent=11 // pred_check
        %p138 = pneg %p71
      $region14: #{residual_layer.3} parent=11 // pred_check_branch
        %140 = sbr.rel (%p138) target = $region16
      $region15: #{residual_layer.3} parent=11 // pred_region
        _
      $region16: #{residual_layer.3} parent=11 // pred_fallthru
        _
    $region12: #{residual_layer.3} parent=5 // pred_fallthru
      _
    %p141 = scmp.lt.s32.totalorder %s10, 2
    // Predicated region
    $region17: #{residual_layer.3} parent=5 // pred_check
      %p142 = pneg %p141
    $region18: #{residual_layer.3} parent=5 // pred_check_branch
      %144 = sbr.rel (%p142) target = $region20
    $region19: #{residual_layer.3} parent=5 // pred_region
      // Predicated region
      $region21: #{residual_layer.3} parent=19 // pred_check
        %p145 = pneg %p44
      $region22: #{residual_layer.3} parent=19 // pred_check_branch
        %147 = sbr.rel (%p145) target = $region24
      $region23: #{residual_layer.3} parent=19 // pred_region
        %p148 = scmp.lt.s32.totalorder %s17, 1
        %s149 = scalar_select %p148, %s17, 1
        %p150 = scmp.lt.s32.totalorder %s18, 0
        %s151 = scalar_select %p150, %s18, 0
        %s152 = sadd.s32 %s151, %s149
        %s153 = smul.addr %s152, 4
        %s154 = scalar_lea.vmem %s0, %s153
      $region24: #{residual_layer.3} parent=19 // pred_fallthru
        _
    $region20: #{residual_layer.3} parent=5 // pred_fallthru
      _
    %p155 = scmp.le.s32.totalorder 1, %s10
    %p156 = scmp.lt.s32.totalorder %s10, 3
    %p157 = pnand %p155, %p156
    %p158 = pneg %p157
    // Predicated region
    $region25: #{residual_layer.3} parent=5 // pred_check
      _
    $region26: #{residual_layer.3} parent=5 // pred_check_branch
      %160 = sbr.rel (%p157) target = $region28
    $region27: #{residual_layer.3} parent=5 // pred_region
      %s161 = ssub.s32 %s10, 1
      %p162 = scmp.lt.s32.totalorder %s19, 1
      %s163 = scalar_select %p162, %s19, 1
      %p164 = scmp.lt.s32.totalorder %s20, 0
      %s165 = scalar_select %p164, %s20, 0
      %s166 = sadd.s32 %s165, %s163
      %s167 = smul.addr %s166, 4
      %s168 = scalar_lea.vmem %s0, %s167
      %p169 = pneg %p50
      %p170 = pneg %p47
      %p171 = pneg %p71
      %p172 = pneg %p68
      %p173 = pneg %p97
      %p174 = pneg %p94
      %p175 = scmp.lt.s32.totalorder %s19, 1
      %s176 = scalar_select %p175, %s19, 1
      %s177 = smul.addr %s176, 8
      %s178 = scalar_lea.vmem %s2, %s177
      %p179 = pneg %p123
      %p180 = pneg %p120
      %p181 = scmp.lt.s32.totalorder %s19, 1
      %s182 = scalar_select %p181, %s19, 1
      %s183 = smul.addr %s182, 8
      %s184 = scalar_lea.vmem %s3, %s183
      %p185 = scmp.lt.s32.totalorder %s19, 1
      %s186 = scalar_select %p185, %s19, 1
      %p187 = scmp.lt.s32.totalorder %s20, 0
      %s188 = scalar_select %p187, %s20, 0
      %s189 = sadd.s32 %s188, %s186
      %s190 = smul.addr %s189, 4
      %s191 = scalar_lea.vmem %s0, %s190
      %p192 = scmp.lt.s32.totalorder %s19, 1
      %s193 = scalar_select %p192, %s19, 1
      %s194 = smul.addr %s193, 8
      %s195 = scalar_lea.vmem %s2, %s194
      %p196 = scmp.lt.s32.totalorder %s19, 1
      %s197 = scalar_select %p196, %s19, 1
      %s198 = smul.addr %s197, 8
      %s199 = scalar_lea.vmem %s3, %s198
      %p200 = scmp.eq.s32.totalorder %s20, 0
      // Predicated region
      $region29: #{residual_layer.3} parent=27 // pred_check
        %p201 = pneg %p200
      $region30: #{residual_layer.3} parent=27 // pred_check_branch
        %203 = sbr.rel (%p201) target = $region32
      $region31: #{residual_layer.3} parent=27 // pred_region
        %vm204 = vcmask 7168
        %205 = vst.msk [vmem:[%s195] sm:$0xff] %vm204, 0.0
        %206 = vst.msk [vmem:[%s199] sm:$0xff] %vm204, 0.0
      $region32: #{residual_layer.3} parent=27 // pred_fallthru
        _
      %v207 = vld [vmem:[%s1] sm:$0xff]
      %v208 = vld [vmem:[%s191] sm:$0xf]
      %vm209 = vcmask 31744
      %v211 = vsel %vm209, %v207, 0
      %vm213 = vcmask 1043456
      %v215 = vsel %vm213, %v208, 0
      %217 = vmatpush.msra.mxu0 0.0
      %218 = vmatpush.msra.mxu0 0.0
      %219 = vmatpush.msra.mxu0 0.0
      %220 = vmatpush.msra.mxu0 0.0
      %221 = vmatpush.msra.mxu0 0.0
      %222 = vmatpush.msra.mxu0 0.0
      %223 = vmatpush.msra.mxu0 0.0
      %224 = vmatpush.msra.mxu0 0.0
      %225 = vmatpush.msra.mxu0 0.0
      %226 = vmatpush.msra.mxu0 0.0
      %227 = vmatpush.msra.mxu0 0.0
      %228 = vmatpush.msra.mxu0 0.0
      %229 = vmatpush.msra.mxu0 0.0
      %230 = vmatpush.msra.mxu0 0.0
      %231 = vmatpush.msra.mxu0 0.0
      %232 = vmatpush.msra.mxu0 %v215
      %233 = vmatmul.f32.gmra.mxu0 %v211
      %v234 = vpop.f32.mrf.mxu0
      %v235 = vadd.f32 0.0, %v234
      %236 = vdwg.mxu0
      %v237 = vld [vmem:[%s195] sm:$0xff]
      %238 = vadd.xlane.f32.xlu0 %v235
      %v239 = vpop.xlane.xlu0 %238
      %v240 = vadd.f32 %v237, %v239
      %vm241 = vcmask 7168
      %242 = vst.msk [vmem:[%s195] sm:$0xff] %vm241, %v240
      %v243 = vld [vmem:[%s199] sm:$0xff]
      %v244 = vmul.f32 %v235, %v235
      %245 = vadd.xlane.f32.xlu0 %v244
      %v246 = vpop.xlane.xlu0 %245
      %v247 = vadd.f32 %v243, %v246
      %248 = vst.msk [vmem:[%s199] sm:$0xff] %vm241, %v247
      %p249 = scmp.lt.s32.totalorder %s19, 1
      %s250 = scalar_select %p249, %s19, 1
      %s251 = smul.addr %s250, 8
      %s252 = scalar_lea.vmem %s2, %s251
      %p253 = scmp.lt.s32.totalorder %s19, 1
      %s254 = scalar_select %p253, %s19, 1
      %s255 = smul.addr %s254, 8
      %s256 = scalar_lea.vmem %s3, %s255
      // Predicated region
      $region33: #{residual_layer.3} parent=27 // pred_check
        %p257 = pneg %p94
      $region34: #{residual_layer.3} parent=27 // pred_check_branch
        %259 = sbr.rel (%p257) target = $region36
      $region35: #{residual_layer.3} parent=27 // pred_region
        _
      $region36: #{residual_layer.3} parent=27 // pred_fallthru
        _
      // Predicated region
      $region37: #{residual_layer.3} parent=27 // pred_check
        %p260 = pneg %p120
      $region38: #{residual_layer.3} parent=27 // pred_check_branch
        %262 = sbr.rel (%p260) target = $region40
      $region39: #{residual_layer.3} parent=27 // pred_region
        _
      $region40: #{residual_layer.3} parent=27 // pred_fallthru
        _
    $region28: #{residual_layer.3} parent=5 // pred_fallthru
      _
    %p263 = scmp.le.s32.totalorder 2, %s10
    // Predicated region
    $region41: #{residual_layer.3} parent=5 // pred_check
      %p264 = pneg %p263
    $region42: #{residual_layer.3} parent=5 // pred_check_branch
      %266 = sbr.rel (%p264) target = $region44
    $region43: #{residual_layer.3} parent=5 // pred_region
      %s267 = ssub.s32 %s10, 2
      // Predicated region
      $region45: #{residual_layer.3} parent=43 // pred_check
        %p268 = pneg %p100
      $region46: #{residual_layer.3} parent=43 // pred_check_branch
        %270 = sbr.rel (%p268) target = $region48
      $region47: #{residual_layer.3} parent=43 // pred_region
        %p271 = scmp.lt.s32.totalorder %s21, 1
        %s272 = scalar_select %p271, %s21, 1
        %s273 = smul.addr %s272, 8
        %s274 = scalar_lea.vmem %s2, %s273
      $region48: #{residual_layer.3} parent=43 // pred_fallthru
        _
      // Predicated region
      $region49: #{residual_layer.3} parent=43 // pred_check
        %p275 = pneg %p126
      $region50: #{residual_layer.3} parent=43 // pred_check_branch
        %277 = sbr.rel (%p275) target = $region52
      $region51: #{residual_layer.3} parent=43 // pred_region
        %p278 = scmp.lt.s32.totalorder %s21, 1
        %s279 = scalar_select %p278, %s21, 1
        %s280 = smul.addr %s279, 8
        %s281 = scalar_lea.vmem %s3, %s280
      $region52: #{residual_layer.3} parent=43 // pred_fallthru
        _
    $region44: #{residual_layer.3} parent=5 // pred_fallthru
      _
  $region6: #{residual_layer.3} parent=0 // loop_footer
    %s14 = sadd.s32 1, %s10
  $region7: #{residual_layer.3} parent=0 // loop_footer_branch
    %9 = sbr.rel target = $region3
  $region8: #{residual_layer.3} parent=0 // loop_exit
    _

// kernel: residual_layer.4
$region0: #{residual_layer.4}
  #allocation0 [shape = 'u32[]', space=smem, size = 0x4, offset = 0x4, fixed_abs, tag = 'smem constant byte address 0x4 - core index']
  #allocation1 [shape = 'u32[72,128]{1,0:T(1,128)}', space=vmem, size = 0x9000, scoped, tag = 'internal scratch']
  #allocation2 [shape = 'f32[1,1]{1,0:T(1,128)S(6)}', space=smem, size = 0x200, scoped, tag = 'scoped memory for residual_layer.4']
  %s0 = inlined_call_operand.vmem [shape: f32[2,4,128], index: 0, kind: input, shape index: {}]
  %s1 = inlined_call_operand.vmem [shape: f32[8,4], index: 1, kind: input, shape index: {}]
  %s2 = inlined_call_operand.vmem [shape: f32[8,1], index: 2, kind: input, shape index: {}]
  %s3 = inlined_call_operand.<no memory space> [shape: f32[1,1], index: 3, kind: input, shape index: {}]
  %s4 = inlined_call_operand.vmem [shape: f32[4,8], index: 4, kind: input, shape index: {}]
  %s5 = inlined_call_operand.vmem [shape: f32[2,4,1], index: 5, kind: output, shape index: {0}]
  %s6 = inlined_call_operand.vmem [shape: f32[2,4,1], index: 6, kind: output, shape index: {1}]
  %7 = xla_tuple %s5, %s6
  %s8 = sld [smem:[#allocation0]]
  $region65: #{residual_layer.4} parent=0
    _
  %s10 = ssub.s32 1, %s8
  %s11 = scalar_select 0, %s10, %s8
  %12 = sst [smem:[#allocation2]] %s3
  loop: start=0, step=1, limit=4
  $region2: #{residual_layer.4} parent=0 // loop_pre_header
    _
  $region3: #{residual_layer.4} parent=0 // loop_header
    %s14 = sphi 0, %s18
    %p15 = scmp.ge.s32.totalorder %s14, 4
    %s21 = sphi 0, %s33
    %s22 = sphi 0, %s29
    %s23 = sphi 0, %s21
    %s24 = sphi 0, %s22
    %s25 = sphi 0, %s23
    %s26 = sphi 0, %s24
    %s38 = sphi 0, %s40
    %s41 = sphi 0, %s38
    %s42 = sphi 0, %s41
    %s58 = sphi 0, %s42
    %s62 = sphi 0, %s62
    %s64 = sphi 0, %s62
    %s65 = sphi 0, %s64
    %s79 = sphi 0, %s65
    %s83 = sphi 0, %s83
    %s85 = sphi 0, %s83
    %s86 = sphi 0, %s85
    %s100 = sphi 0, %s86
    %s104 = sphi 0, %s104
    %s106 = sphi 0, %s104
    %s107 = sphi 0, %s106
    %s121 = sphi 0, %s107
    %s125 = sphi 0, %s125
    %s127 = sphi 0, %s125
    %s128 = sphi 0, %s127
    %s142 = sphi 0, %s128
    %s148 = sphi 0, %s150
    %s151 = sphi 0, %s148
    %s152 = sphi 0, %s151
    %s168 = sphi 0, %s152
    %s174 = sphi 0, %s176
    %s177 = sphi 0, %s174
    %s178 = sphi 0, %s177
    %s194 = sphi 0, %s178
  $region4: #{residual_layer.4} parent=0 // loop_header_branch
    %17 = sbr.rel (%p15) target = $region8
  $region5: #{residual_layer.4} parent=0 // loop_body
    %s19 = ssub.s32 %s14, 1
    %s20 = ssub.s32 %s14, 2
    %s27 = sadd.s32 1, %s22
    %p28 = scmp.ge.s32.totalorder %s27, 1
    %s29 = scalar_select %p28, 0, %s27
    %s30 = sadd.s32 1, %s21
    %s31 = scalar_select %p28, %s30, %s21
    %p32 = scmp.ge.s32.totalorder %s31, 2
    %s33 = scalar_select %p32, 0, %s31
    %s34 = ssub.s32 %s21, %s33
    %s35 = ssub.s32 %s22, %s29
    %s36 = sor.u32 %s34, %s35
    %p37 = scmp.eq.s32.totalorder %s36, 0
    %s39 = sadd.s32 %s38, 1
    %s40 = scalar_select %p37, %s38, %s39
    %p43 = pneg %p37
    %p44 = scmp.eq.s32.totalorder %s14, 1
    %p45 = por %p43, %p44
    %p46 = scmp.ne.s32.totalorder %s38, %s41
    %p47 = scmp.eq.s32.totalorder %s14, 0
    %p48 = por %p46, %p47
    %p49 = scmp.ne.s32.totalorder %s38, %s41
    %p50 = scmp.eq.s32.totalorder %s19, 1
    %p51 = por %p49, %p50
    %p52 = scmp.ne.s32.totalorder %s41, %s42
    %p53 = scmp.eq.s32.totalorder %s19, 0
    %p54 = por %p52, %p53
    %p55 = scmp.ne.s32.totalorder %s41, %s42
    %p56 = scmp.eq.s32.totalorder %s20, 1
    %p57 = por %p55, %p56
    %p59 = scmp.ne.s32.totalorder %s42, %s58
    %p60 = scmp.eq.s32.totalorder %s20, 0
    %p61 = por %p59, %p60
    %s63 = sadd.s32 %s62, 1
    %p66 = scmp.eq.s32.totalorder %s14, 1
    %p67 = scmp.ne.s32.totalorder %s62, %s64
    %p68 = scmp.eq.s32.totalorder %s14, 0
    %p69 = por %p67, %p68
    %p70 = scmp.ne.s32.totalorder %s62, %s64
    %p71 = scmp.eq.s32.totalorder %s19, 1
    %p72 = por %p70, %p71
    %p73 = scmp.ne.s32.totalorder %s64, %s65
    %p74 = scmp.eq.s32.totalorder %s19, 0
    %p75 = por %p73, %p74
    %p76 = scmp.ne.s32.totalorder %s64, %s65
    %p77 = scmp.eq.s32.totalorder %s20, 1
    %p78 = por %p76, %p77
    %p80 = scmp.ne.s32.totalorder %s65, %s79
    %p81 = scmp.eq.s32.totalorder %s20, 0
    %p82 = por %p80, %p81
    %s84 = sadd.s32 %s83, 1
    %p87 = scmp.eq.s32.totalorder %s14, 1
    %p88 = scmp.ne.s32.totalorder %s83, %s85
    %p89 = scmp.eq.s32.totalorder %s14, 0
    %p90 = por %p88, %p89
    %p91 = scmp.ne.s32.totalorder %s83, %s85
    %p92 = scmp.eq.s32.totalorder %s19, 1
    %p93 = por %p91, %p92
    %p94 = scmp.ne.s32.totalorder %s85, %s86
    %p95 = scmp.eq.s32.totalorder %s19, 0
    %p96 = por %p94, %p95
    %p97 = scmp.ne.s32.totalorder %s85, %s86
    %p98 = scmp.eq.s32.totalorder %s20, 1
    %p99 = por %p97, %p98
    %p101 = scmp.ne.s32.totalorder %s86, %s100
    %p102 = scmp.eq.s32.totalorder %s20, 0
    %p103 = por %p101, %p102
    %s105 = sadd.s32 %s104, 1
    %p108 = scmp.eq.s32.totalorder %s14, 1
    %p109 = scmp.ne.s32.totalorder %s104, %s106
    %p110 = scmp.eq.s32.totalorder %s14, 0
    %p111 = por %p109, %p110
    %p112 = scmp.ne.s32.totalorder %s104, %s106
    %p113 = scmp.eq.s32.totalorder %s19, 1
    %p114 = por %p112, %p113
    %p115 = scmp.ne.s32.totalorder %s106, %s107
    %p116 = scmp.eq.s32.totalorder %s19, 0
    %p117 = por %p115, %p116
    %p118 = scmp.ne.s32.totalorder %s106, %s107
    %p119 = scmp.eq.s32.totalorder %s20, 1
    %p120 = por %p118, %p119
    %p122 = scmp.ne.s32.totalorder %s107, %s121
    %p123 = scmp.eq.s32.totalorder %s20, 0
    %p124 = por %p122, %p123
    %s126 = sadd.s32 %s125, 1
    %p129 = scmp.eq.s32.totalorder %s14, 1
    %p130 = scmp.ne.s32.totalorder %s125, %s127
    %p131 = scmp.eq.s32.totalorder %s14, 0
    %p132 = por %p130, %p131
    %p133 = scmp.ne.s32.totalorder %s125, %s127
    %p134 = scmp.eq.s32.totalorder %s19, 1
    %p135 = por %p133, %p134
    %p136 = scmp.ne.s32.totalorder %s127, %s128
    %p137 = scmp.eq.s32.totalorder %s19, 0
    %p138 = por %p136, %p137
    %p139 = scmp.ne.s32.totalorder %s127, %s128
    %p140 = scmp.eq.s32.totalorder %s20, 1
    %p141 = por %p139, %p140
    %p143 = scmp.ne.s32.totalorder %s128, %s142
    %p144 = scmp.eq.s32.totalorder %s20, 0
    %p145 = por %p143, %p144
    %s146 = ssub.s32 %s21, %s33
    %p147 = scmp.eq.s32.totalorder %s146, 0
    %s149 = sadd.s32 %s148, 1
    %s150 = scalar_select %p147, %s148, %s149
    %p153 = pneg %p147
    %p154 = scmp.eq.s32.totalorder %s14, 1
    %p155 = por %p153, %p154
    %p156 = scmp.ne.s32.totalorder %s148, %s151
    %p157 = scmp.eq.s32.totalorder %s14, 0
    %p158 = por %p156, %p157
    %p159 = scmp.ne.s32.totalorder %s148, %s151
    %p160 = scmp.eq.s32.totalorder %s19, 1
    %p161 = por %p159, %p160
    %p162 = scmp.ne.s32.totalorder %s151, %s152
    %p163 = scmp.eq.s32.totalorder %s19, 0
    %p164 = por %p162, %p163
    %p165 = scmp.ne.s32.totalorder %s151, %s152
    %p166 = scmp.eq.s32.totalorder %s20, 1
    %p167 = por %p165, %p166
    %p169 = scmp.ne.s32.totalorder %s152, %s168
    %p170 = scmp.eq.s32.totalorder %s20, 0
    %p171 = por %p169, %p170
    %s172 = ssub.s32 %s21, %s33
    %p173 = scmp.eq.s32.totalorder %s172, 0
    %s175 = sadd.s32 %s174, 1
    %s176 = scalar_select %p173, %s174, %s175
    %p179 = pneg %p173
    %p180 = scmp.eq.s32.totalorder %s14, 1
    %p181 = por %p179, %p180
    %p182 = scmp.ne.s32.totalorder %s174, %s177
    %p183 = scmp.eq.s32.totalorder %s14, 0
    %p184 = por %p182, %p183
    %p185 = scmp.ne.s32.totalorder %s174, %s177
    %p186 = scmp.eq.s32.totalorder %s19, 1
    %p187 = por %p185, %p186
    %p188 = scmp.ne.s32.totalorder %s177, %s178
    %p189 = scmp.eq.s32.totalorder %s19, 0
    %p190 = por %p188, %p189
    %p191 = scmp.ne.s32.totalorder %s177, %s178
    %p192 = scmp.eq.s32.totalorder %s20, 1
    %p193 = por %p191, %p192
    %p195 = scmp.ne.s32.totalorder %s178, %s194
    %p196 = scmp.eq.s32.totalorder %s20, 0
    %p197 = por %p195, %p196
    %p198 = scmp.le.s32.totalorder 1, %s14
    %p199 = scmp.lt.s32.totalorder %s14, 3
    %p200 = pnand %p198, %p199
    %p201 = pneg %p200
    // Predicated region
    $region9: #{residual_layer.4} parent=5 // pred_check
      _
    $region10: #{residual_layer.4} parent=5 // pred_check_branch
      %203 = sbr.rel (%p200) target = $region12
    $region11: #{residual_layer.4} parent=5 // pred_region
      %s204 = ssub.s32 %s14, 1
      // Predicated region
      $region13: #{residual_layer.4} parent=11 // pred_check
        %p205 = pneg %p75
      $region14: #{residual_layer.4} parent=11 // pred_check_branch
        %207 = sbr.rel (%p205) target = $region16
      $region15: #{residual_layer.4} parent=11 // pred_region
        _
      $region16: #{residual_layer.4} parent=11 // pred_fallthru
        _
      // Predicated region
      $region17: #{residual_layer.4} parent=11 // pred_check
        %p208 = pneg %p96
      $region18: #{residual_layer.4} parent=11 // pred_check_branch
        %210 = sbr.rel (%p208) target = $region20
      $region19: #{residual_layer.4} parent=11 // pred_region
        _
      $region20: #{residual_layer.4} parent=11 // pred_fallthru
        _
      // Predicated region
      $region21: #{residual_layer.4} parent=11 // pred_check
        %p211 = pneg %p117
      $region22: #{residual_layer.4} parent=11 // pred_check_branch
        %213 = sbr.rel (%p211) target = $region24
      $region23: #{residual_layer.4} parent=11 // pred_region
        _
      $region24: #{residual_layer.4} parent=11 // pred_fallthru
        _
      // Predicated region
      $region25: #{residual_layer.4} parent=11 // pred_check
        %p214 = pneg %p138
      $region26: #{residual_layer.4} parent=11 // pred_check_branch
        %216 = sbr.rel (%p214) target = $region28
      $region27: #{residual_layer.4} parent=11 // pred_region
        _
      $region28: #{residual_layer.4} parent=11 // pred_fallthru
        _
    $region12: #{residual_layer.4} parent=5 // pred_fallthru
      _
    %p217 = scmp.lt.s32.totalorder %s14, 2
    // Predicated region
    $region29: #{residual_layer.4} parent=5 // pred_check
      %p218 = pneg %p217
    $region30: #{residual_layer.4} parent=5 // pred_check_branch
      %220 = sbr.rel (%p218) target = $region32
    $region31: #{residual_layer.4} parent=5 // pred_region
      // Predicated region
      $region33: #{residual_layer.4} parent=31 // pred_check
        %p221 = pneg %p48
      $region34: #{residual_layer.4} parent=31 // pred_check_branch
        %223 = sbr.rel (%p221) target = $region36
      $region35: #{residual_layer.4} parent=31 // pred_region
        %p224 = scmp.lt.s32.totalorder %s21, 1
        %s225 = scalar_select %p224, %s21, 1
        %p226 = scmp.lt.s32.totalorder %s22, 0
        %s227 = scalar_select %p226, %s22, 0
        %s228 = sadd.s32 %s227, %s225
        %s229 = smul.addr %s228, 4
        %s230 = scalar_lea.vmem %s0, %s229
      $region36: #{residual_layer.4} parent=31 // pred_fallthru
        _
    $region32: #{residual_layer.4} parent=5 // pred_fallthru
      _
    %p231 = scmp.le.s32.totalorder 1, %s14
    %p232 = scmp.lt.s32.totalorder %s14, 3
    %p233 = pnand %p231, %p232
    %p234 = pneg %p233
    // Predicated region
    $region37: #{residual_layer.4} parent=5 // pred_check
      _
    $region38: #{residual_layer.4} parent=5 // pred_check_branch
      %236 = sbr.rel (%p233) target = $region40
    $region39: #{residual_layer.4} parent=5 // pred_region
      %s237 = ssub.s32 %s14, 1
      %p238 = scmp.lt.s32.totalorder %s23, 1
      %s239 = scalar_select %p238, %s23, 1
      %p240 = scmp.lt.s32.totalorder %s24, 0
      %s241 = scalar_select %p240, %s24, 0
      %s242 = sadd.s32 %s241, %s239
      %s243 = smul.addr %s242, 4
      %s244 = scalar_lea.vmem %s0, %s243
      %p245 = pneg %p54
      %p246 = pneg %p51
      %p247 = pneg %p75
      %p248 = pneg %p72
      %p249 = pneg %p96
      %p250 = pneg %p93
      %p251 = pneg %p117
      %p252 = pneg %p114
      %p253 = pneg %p138
      %p254 = pneg %p135
      %p255 = pneg %p164
      %p256 = pneg %p161
      %p257 = scmp.lt.s32.totalorder %s23, 1
      %s258 = scalar_select %p257, %s23, 1
      %s259 = smul.addr %s258, 4
      %s260 = scalar_lea.vmem %s5, %s259
      %p261 = pneg %p190
      %p262 = pneg %p187
      %p263 = scmp.lt.s32.totalorder %s23, 1
      %s264 = scalar_select %p263, %s23, 1
      %s265 = smul.addr %s264, 4
      %s266 = scalar_lea.vmem %s6, %s265
      %p267 = scmp.lt.s32.totalorder %s23, 1
      %s268 = scalar_select %p267, %s23, 1
      %p269 = scmp.lt.s32.totalorder %s24, 0
      %s270 = scalar_select %p269, %s24, 0
      %s271 = sadd.s32 %s270, %s268
      %s272 = smul.addr %s271, 4
      %s273 = scalar_lea.vmem %s0, %s272
      %p274 = scmp.lt.s32.totalorder %s23, 1
      %s275 = scalar_select %p274, %s23, 1
      %s276 = smul.addr %s275, 4
      %s277 = scalar_lea.vmem %s5, %s276
      %p278 = scmp.lt.s32.totalorder %s23, 1
      %s279 = scalar_select %p278, %s23, 1
      %s280 = smul.addr %s279, 4
      %s281 = scalar_lea.vmem %s6, %s280
      %p282 = scmp.eq.s32.totalorder %s24, 0
      // Predicated region
      $region41: #{residual_layer.4} parent=39 // pred_check
        %p283 = pneg %p282
      $region42: #{residual_layer.4} parent=39 // pred_check_branch
        %285 = sbr.rel (%p283) target = $region44
      $region43: #{residual_layer.4} parent=39 // pred_region
        %vm286 = vcmask 3072
        %287 = vst.msk [vmem:[%s277] sm:$0xf] %vm286, 0.0
        %288 = vst.msk [vmem:[%s281] sm:$0xf] %vm286, 0.0
      $region44: #{residual_layer.4} parent=39 // pred_fallthru
        _
      %v289 = vld [vmem:[%s1] sm:$0xff]
      %v290 = vld [vmem:[%s273] sm:$0xf]
      %v291 = vld [vmem:[%s2] sm:$0xff]
      %293 = vset.pattern.permute.xlu0 0
      %294 = vperm.xlu0 %293, %v291
      %v295 = vpop.permute.xlu0 %294
      %vm297 = vcmask 31744
      %v299 = vsel %vm297, %v289, 0
      %vm301 = vcmask 1043456
      %v303 = vsel %vm301, %v290, 0
      %305 = vmatpush.msra.mxu0 0.0
      %306 = vmatpush.msra.mxu0 0.0
      %307 = vmatpush.msra.mxu0 0.0
      %308 = vmatpush.msra.mxu0 0.0
      %309 = vmatpush.msra.mxu0 0.0
      %310 = vmatpush.msra.mxu0 0.0
      %311 = vmatpush.msra.mxu0 0.0
      %312 = vmatpush.msra.mxu0 0.0
      %313 = vmatpush.msra.mxu0 0.0
      %314 = vmatpush.msra.mxu0 0.0
      %315 = vmatpush.msra.mxu0 0.0
      %316 = vmatpush.msra.mxu0 0.0
      %317 = vmatpush.msra.mxu0 0.0
      %318 = vmatpush.msra.mxu0 0.0
      %319 = vmatpush.msra.mxu0 0.0
      %320 = vmatpush.msra.mxu0 %v303
      %321 = vmatmul.f32.gmra.mxu0 %v299
      %v322 = vpop.f32.mrf.mxu0
      %v323 = vadd.f32 %v295, %v322
      %324 = vdwg.mxu0
      %s325 = sld [smem:[#allocation2]]
      %vm326 = vcmp.gt.f32.partialorder %v323, 0.0
      %v327 = vstv %s325
      %v328 = vmul.f32 %v327, %v323
      %v329 = vsel %vm326, %v323, %v328
      %v330 = vld [vmem:[%s4] sm:$0xf]
      %vm331 = vcmask 64512
      %v333 = vsel %vm331, %v330, 0
      %335 = vmatpush.msra.mxu0 0.0
      %336 = vmatpush.msra.mxu0 0.0
      %337 = vmatpush.msra.mxu0 0.0
      %338 = vmatpush.msra.mxu0 0.0
      %339 = vmatpush.msra.mxu0 0.0
      %340 = vmatpush.msra.mxu0 0.0
      %341 = vmatpush.msra.mxu0 0.0
      %342 = vmatpush.msra.mxu0 0.0
      %343 = vmatpush.msra.mxu0 0.0
      %344 = vmatpush.msra.mxu0 0.0
      %345 = vmatpush.msra.mxu0 0.0
      %346 = vmatpush.msra.mxu0 0.0
      %347 = vmatpush.msra.mxu0 0.0
      %348 = vmatpush.msra.mxu0 0.0
      %349 = vmatpush.msra.mxu0 0.0
      %350 = vmatpush.msra.mxu0 %v329
      %351 = vmatmul.f32.gmra.mxu0 %v333
      %v352 = vpop.f32.mrf.mxu0
      %v353 = vadd.f32 0.0, %v352
      %354 = vdwg.mxu0
      %v355 = vld [vmem:[%s277] sm:$0xf]
      %v356 = vsel %vm301, %v353, 0.0
      %357 = vadd.xlane.f32.xlu0 %v356
      %v358 = vpop.xlane.xlu0 %357
      %v359 = vadd.f32 %v355, %v358
      %vm360 = vcmask 3072
      %361 = vst.msk [vmem:[%s277] sm:$0xf] %vm360, %v359
      %v362 = vld [vmem:[%s281] sm:$0xf]
      %v363 = vmul.f32 %v353, %v353
      %v364 = vsel %vm301, %v363, 0.0
      %365 = vadd.xlane.f32.xlu0 %v364
      %v366 = vpop.xlane.xlu0 %365
      %v367 = vadd.f32 %v362, %v366
      %368 = vst.msk [vmem:[%s281] sm:$0xf] %vm360, %v367
      %p369 = scmp.lt.s32.totalorder %s23, 1
      %s370 = scalar_select %p369, %s23, 1
      %s371 = smul.addr %s370, 4
      %s372 = scalar_lea.vmem %s5, %s371
      %p373 = scmp.lt.s32.totalorder %s23, 1
      %s374 = scalar_select %p373, %s23, 1
      %s375 = smul.addr %s374, 4
      %s376 = scalar_lea.vmem %s6, %s375
      // Predicated region
      $region45: #{residual_layer.4} parent=39 // pred_check
        %p377 = pneg %p161
      $region46: #{residual_layer.4} parent=39 // pred_check_branch
        %379 = sbr.rel (%p377) target = $region48
      $region47: #{residual_layer.4} parent=39 // pred_region
        _
      $region48: #{residual_layer.4} parent=39 // pred_fallthru
        _
      // Predicated region
      $region49: #{residual_layer.4} parent=39 // pred_check
        %p380 = pneg %p187
      $region50: #{residual_layer.4} parent=39 // pred_check_branch
        %382 = sbr.rel (%p380) target = $region52
      $region51: #{residual_layer.4} parent=39 // pred_region
        _
      $region52: #{residual_layer.4} parent=39 // pred_fallthru
        _
    $region40: #{residual_layer.4} parent=5 // pred_fallthru
      _
    %p383 = scmp.le.s32.totalorder 2, %s14
    // Predicated region
    $region53: #{residual_layer.4} parent=5 // pred_check
      %p384 = pneg %p383
    $region54: #{residual_layer.4} parent=5 // pred_check_branch
      %386 = sbr.rel (%p384) target = $region56
    $region55: #{residual_layer.4} parent=5 // pred_region
      %s387 = ssub.s32 %s14, 2
      // Predicated region
      $region57: #{residual_layer.4} parent=55 // pred_check
        %p388 = pneg %p167
      $region58: #{residual_layer.4} parent=55 // pred_check_branch
        %390 = sbr.rel (%p388) target = $region60
      $region59: #{residual_layer.4} parent=55 // pred_region
        %p391 = scmp.lt.s32.totalorder %s25, 1
        %s392 = scalar_select %p391, %s25, 1
        %s393 = smul.addr %s392, 4
        %s394 = scalar_lea.vmem %s5, %s393
      $region60: #{residual_layer.4} parent=55 // pred_fallthru
        _
      // Predicated region
      $region61: #{residual_layer.4} parent=55 // pred_check
        %p395 = pneg %p193
      $region62: #{residual_layer.4} parent=55 // pred_check_branch
        %397 = sbr.rel (%p395) target = $region64
      $region63: #{residual_layer.4} parent=55 // pred_region
        %p398 = scmp.lt.s32.totalorder %s25, 1
        %s399 = scalar_select %p398, %s25, 1
        %s400 = smul.addr %s399, 4
        %s401 = scalar_lea.vmem %s6, %s400
      $region64: #{residual_layer.4} parent=55 // pred_fallthru
        _
    $region56: #{residual_layer.4} parent=5 // pred_fallthru
      _
  $region6: #{residual_layer.4} parent=0 // loop_footer
    %s18 = sadd.s32 1, %s14
  $region7: #{residual_layer.4} parent=0 // loop_footer_branch
    %13 = sbr.rel target = $region3
  $region8: #{residual_layer.4} parent=0 // loop_exit
    _

// kernel: residual_layer.5
$region0: #{residual_layer.5}
  #allocation0 [shape = 'u32[]', space=smem, size = 0x4, offset = 0x4, fixed_abs, tag = 'smem constant byte address 0x4 - core index']
  #allocation1 [shape = 'u32[72,128]{1,0:T(1,128)}', space=vmem, size = 0x9000, scoped, tag = 'internal scratch']
  #allocation2 [shape = 'f32[1,1]{1,0:T(1,128)S(6)}', space=smem, size = 0x200, scoped, tag = 'scoped memory for residual_layer.5']
  #allocation3 [shape = 'f32[1,1]{1,0:T(1,128)S(6)}', space=smem, size = 0x200, scoped, tag = 'scoped memory for residual_layer.5']
  %s0 = inlined_call_operand.vmem [shape: f32[2,4,128], index: 0, kind: input, shape index: {}]
  %s1 = inlined_call_operand.vmem [shape: f32[8,4], index: 1, kind: input, shape index: {}]
  %s2 = inlined_call_operand.vmem [shape: f32[8,1], index: 2, kind: input, shape index: {}]
  %s3 = inlined_call_operand.<no memory space> [shape: f32[1,1], index: 3, kind: input, shape index: {}]
  %s4 = inlined_call_operand.vmem [shape: f32[4,8], index: 4, kind: input, shape index: {}]
  %s5 = inlined_call_operand.vmem [shape: f32[4,1], index: 5, kind: input, shape index: {}]
  %s6 = inlined_call_operand.<no memory space> [shape: f32[1,1], index: 6, kind: input, shape index: {}]
  %s7 = inlined_call_operand.hbm [shape: f32[2,4,128], index: 7, kind: output, shape index: {}]
  %s8 = sld [smem:[#allocation0]]
  $region61: #{residual_layer.5} parent=0
    _
  %s10 = ssub.s32 1, %s8
  %s11 = scalar_select 0, %s10, %s8
  %12 = sst [smem:[#allocation2]] %s3
  %13 = sst [smem:[#allocation3]] %s6
  $region1: #{residual_layer.5} parent=0
    #allocation4 [shape = 'u8[4096]{0}', space=vmem, size = 0x1000, scoped, tag = 'output window, operand 0']
    #allocation5 [shape = 's32[2]{0}', space=sflag, size = 0x8, scoped, tag = 'scoped memory for residual_layer.5']
    %14 = vsyncpa [#allocation5], 0
    %s15 = scalar_lea.sflag [#allocation5], 1
    %16 = vsyncpa %s15, 0
    loop: start=0, step=1, limit=4
    $region2: #{residual_layer.5} parent=1 // loop_pre_header
      _
    $region3: #{residual_layer.5} parent=1 // loop_header
      %s18 = sphi 0, %s22
      %p19 = scmp.ge.s32.totalorder %s18, 4
      %s25 = sphi 0, %s37
      %s26 = sphi 0, %s33
      %s27 = sphi 0, %s25
      %s28 = sphi 0, %s26
      %s29 = sphi 0, %s27
      %s30 = sphi 0, %s28
      %s42 = sphi 0, %s44
      %s45 = sphi 0, %s42
      %s46 = sphi 0, %s45
      %s62 = sphi 0, %s46
      %s66 = sphi 0, %s66
      %s68 = sphi 0, %s66
      %s69 = sphi 0, %s68
      %s83 = sphi 0, %s69
      %s87 = sphi 0, %s87
      %s89 = sphi 0, %s87
      %s90 = sphi 0, %s89
      %s104 = sphi 0, %s90
      %s108 = sphi 0, %s108
      %s110 = sphi 0, %s108
      %s111 = sphi 0, %s110
      %s125 = sphi 0, %s111
      %s129 = sphi 0, %s129
      %s131 = sphi 0, %s129
      %s132 = sphi 0, %s131
      %s146 = sphi 0, %s132
      %s150 = sphi 0, %s150
      %s152 = sphi 0, %s150
      %s153 = sphi 0, %s152
      %s167 = sphi 0, %s153
      %s171 = sphi 0, %s171
      %s173 = sphi 0, %s171
      %s174 = sphi 0, %s173
      %s188 = sphi 0, %s174
      %s196 = sphi 0, %s198
      %s199 = sphi 0, %s196
      %s200 = sphi 0, %s199
      %s216 = sphi 0, %s200
    $region4: #{residual_layer.5} parent=1 // loop_header_branch
      %21 = sbr.rel (%p19) target = $region8
    $region5: #{residual_layer.5} parent=1 // loop_body
      %s23 = ssub.s32 %s18, 1
      %s24 = ssub.s32 %s18, 2
      %s31 = sadd.s32 1, %s26
      %p32 = scmp.ge.s32.totalorder %s31, 1
      %s33 = scalar_select %p32, 0, %s31
      %s34 = sadd.s32 1, %s25
      %s35 = scalar_select %p32, %s34, %s25
      %p36 = scmp.ge.s32.totalorder %s35, 2
      %s37 = scalar_select %p36, 0, %s35
      %s38 = ssub.s32 %s25, %s37
      %s39 = ssub.s32 %s26, %s33
      %s40 = sor.u32 %s38, %s39
      %p41 = scmp.eq.s32.totalorder %s40, 0
      %s43 = sadd.s32 %s42, 1
      %s44 = scalar_select %p41, %s42, %s43
      %p47 = pneg %p41
      %p48 = scmp.eq.s32.totalorder %s18, 1
      %p49 = por %p47, %p48
      %p50 = scmp.ne.s32.totalorder %s42, %s45
      %p51 = scmp.eq.s32.totalorder %s18, 0
      %p52 = por %p50, %p51
      %p53 = scmp.ne.s32.totalorder %s42, %s45
      %p54 = scmp.eq.s32.totalorder %s23, 1
      %p55 = por %p53, %p54
      %p56 = scmp.ne.s32.totalorder %s45, %s46
      %p57 = scmp.eq.s32.totalorder %s23, 0
      %p58 = por %p56, %p57
      %p59 = scmp.ne.s32.totalorder %s45, %s46
      %p60 = scmp.eq.s32.totalorder %s24, 1
      %p61 = por %p59, %p60
      %p63 = scmp.ne.s32.totalorder %s46, %s62
      %p64 = scmp.eq.s32.totalorder %s24, 0
      %p65 = por %p63, %p64
      %s67 = sadd.s32 %s66, 1
      %p70 = scmp.eq.s32.totalorder %s18, 1
      %p71 = scmp.ne.s32.totalorder %s66, %s68
      %p72 = scmp.eq.s32.totalorder %s18, 0
      %p73 = por %p71, %p72
      %p74 = scmp.ne.s32.totalorder %s66, %s68
      %p75 = scmp.eq.s32.totalorder %s23, 1
      %p76 = por %p74, %p75
      %p77 = scmp.ne.s32.totalorder %s68, %s69
      %p78 = scmp.eq.s32.totalorder %s23, 0
      %p79 = por %p77, %p78
      %p80 = scmp.ne.s32.totalorder %s68, %s69
      %p81 = scmp.eq.s32.totalorder %s24, 1
      %p82 = por %p80, %p81
      %p84 = scmp.ne.s32.totalorder %s69, %s83
      %p85 = scmp.eq.s32.totalorder %s24, 0
      %p86 = por %p84, %p85
      %s88 = sadd.s32 %s87, 1
      %p91 = scmp.eq.s32.totalorder %s18, 1
      %p92 = scmp.ne.s32.totalorder %s87, %s89
      %p93 = scmp.eq.s32.totalorder %s18, 0
      %p94 = por %p92, %p93
      %p95 = scmp.ne.s32.totalorder %s87, %s89
      %p96 = scmp.eq.s32.totalorder %s23, 1
      %p97 = por %p95, %p96
      %p98 = scmp.ne.s32.totalorder %s89, %s90
      %p99 = scmp.eq.s32.totalorder %s23, 0
      %p100 = por %p98, %p99
      %p101 = scmp.ne.s32.totalorder %s89, %s90
      %p102 = scmp.eq.s32.totalorder %s24, 1
      %p103 = por %p101, %p102
      %p105 = scmp.ne.s32.totalorder %s90, %s104
      %p106 = scmp.eq.s32.totalorder %s24, 0
      %p107 = por %p105, %p106
      %s109 = sadd.s32 %s108, 1
      %p112 = scmp.eq.s32.totalorder %s18, 1
      %p113 = scmp.ne.s32.totalorder %s108, %s110
      %p114 = scmp.eq.s32.totalorder %s18, 0
      %p115 = por %p113, %p114
      %p116 = scmp.ne.s32.totalorder %s108, %s110
      %p117 = scmp.eq.s32.totalorder %s23, 1
      %p118 = por %p116, %p117
      %p119 = scmp.ne.s32.totalorder %s110, %s111
      %p120 = scmp.eq.s32.totalorder %s23, 0
      %p121 = por %p119, %p120
      %p122 = scmp.ne.s32.totalorder %s110, %s111
      %p123 = scmp.eq.s32.totalorder %s24, 1
      %p124 = por %p122, %p123
      %p126 = scmp.ne.s32.totalorder %s111, %s125
      %p127 = scmp.eq.s32.totalorder %s24, 0
      %p128 = por %p126, %p127
      %s130 = sadd.s32 %s129, 1
      %p133 = scmp.eq.s32.totalorder %s18, 1
      %p134 = scmp.ne.s32.totalorder %s129, %s131
      %p135 = scmp.eq.s32.totalorder %s18, 0
      %p136 = por %p134, %p135
      %p137 = scmp.ne.s32.totalorder %s129, %s131
      %p138 = scmp.eq.s32.totalorder %s23, 1
      %p139 = por %p137, %p138
      %p140 = scmp.ne.s32.totalorder %s131, %s132
      %p141 = scmp.eq.s32.totalorder %s23, 0
      %p142 = por %p140, %p141
      %p143 = scmp.ne.s32.totalorder %s131, %s132
      %p144 = scmp.eq.s32.totalorder %s24, 1
      %p145 = por %p143, %p144
      %p147 = scmp.ne.s32.totalorder %s132, %s146
      %p148 = scmp.eq.s32.totalorder %s24, 0
      %p149 = por %p147, %p148
      %s151 = sadd.s32 %s150, 1
      %p154 = scmp.eq.s32.totalorder %s18, 1
      %p155 = scmp.ne.s32.totalorder %s150, %s152
      %p156 = scmp.eq.s32.totalorder %s18, 0
      %p157 = por %p155, %p156
      %p158 = scmp.ne.s32.totalorder %s150, %s152
      %p159 = scmp.eq.s32.totalorder %s23, 1
      %p160 = por %p158, %p159
      %p161 = scmp.ne.s32.totalorder %s152, %s153
      %p162 = scmp.eq.s32.totalorder %s23, 0
      %p163 = por %p161, %p162
      %p164 = scmp.ne.s32.totalorder %s152, %s153
      %p165 = scmp.eq.s32.totalorder %s24, 1
      %p166 = por %p164, %p165
      %p168 = scmp.ne.s32.totalorder %s153, %s167
      %p169 = scmp.eq.s32.totalorder %s24, 0
      %p170 = por %p168, %p169
      %s172 = sadd.s32 %s171, 1
      %p175 = scmp.eq.s32.totalorder %s18, 1
      %p176 = scmp.ne.s32.totalorder %s171, %s173
      %p177 = scmp.eq.s32.totalorder %s18, 0
      %p178 = por %p176, %p177
      %p179 = scmp.ne.s32.totalorder %s171, %s173
      %p180 = scmp.eq.s32.totalorder %s23, 1
      %p181 = por %p179, %p180
      %p182 = scmp.ne.s32.totalorder %s173, %s174
      %p183 = scmp.eq.s32.totalorder %s23, 0
      %p184 = por %p182, %p183
      %p185 = scmp.ne.s32.totalorder %s173, %s174
      %p186 = scmp.eq.s32.totalorder %s24, 1
      %p187 = por %p185, %p186
      %p189 = scmp.ne.s32.totalorder %s174, %s188
      %p190 = scmp.eq.s32.totalorder %s24, 0
      %p191 = por %p189, %p190
      %s192 = ssub.s32 %s25, %s37
      %s193 = ssub.s32 %s26, %s33
      %s194 = sor.u32 %s192, %s193
      %p195 = scmp.eq.s32.totalorder %s194, 0
      %s197 = sadd.s32 %s196, 1
      %s198 = scalar_select %p195, %s196, %s197
      %p201 = pneg %p195
      %p202 = scmp.eq.s32.totalorder %s18, 1
      %p203 = por %p201, %p202
      %p204 = scmp.ne.s32.totalorder %s196, %s199
      %p205 = scmp.eq.s32.totalorder %s18, 0
      %p206 = por %p204, %p205
      %p207 = scmp.ne.s32.totalorder %s196, %s199
      %p208 = scmp.eq.s32.totalorder %s23, 1
      %p209 = por %p207, %p208
      %p210 = scmp.ne.s32.totalorder %s199, %s200
      %p211 = scmp.eq.s32.totalorder %s23, 0
      %p212 = por %p210, %p211
      %p213 = scmp.ne.s32.totalorder %s199, %s200
      %p214 = scmp.eq.s32.totalorder %s24, 1
      %p215 = por %p213, %p214
      %p217 = scmp.ne.s32.totalorder %s200, %s216
      %p218 = scmp.eq.s32.totalorder %s24, 0
      %p219 = por %p217, %p218
      %p220 = scmp.le.s32.totalorder 1, %s18
      %p221 = scmp.lt.s32.totalorder %s18, 3
      %p222 = pnand %p220, %p221
      %p223 = pneg %p222
      // Predicated region
      $region9: #{residual_layer.5} parent=5 // pred_check
        _
      $region10: #{residual_layer.5} parent=5 // pred_check_branch
        %225 = sbr.rel (%p222) target = $region12
      $region11: #{residual_layer.5} parent=5 // pred_region
        %s226 = ssub.s32 %s18, 1
        // Predicated region
        $region13: #{residual_layer.5} parent=11 // pred_check
          %p227 = pneg %p79
        $region14: #{residual_layer.5} parent=11 // pred_check_branch
          %229 = sbr.rel (%p227) target = $region16
        $region15: #{residual_layer.5} parent=11 // pred_region
          _
        $region16: #{residual_layer.5} parent=11 // pred_fallthru
          _
        // Predicated region
        $region17: #{residual_layer.5} parent=11 // pred_check
          %p230 = pneg %p100
        $region18: #{residual_layer.5} parent=11 // pred_check_branch
          %232 = sbr.rel (%p230) target = $region20
        $region19: #{residual_layer.5} parent=11 // pred_region
          _
        $region20: #{residual_layer.5} parent=11 // pred_fallthru
          _
        // Predicated region
        $region21: #{residual_layer.5} parent=11 // pred_check
          %p233 = pneg %p121
        $region22: #{residual_layer.5} parent=11 // pred_check_branch
          %235 = sbr.rel (%p233) target = $region24
        $region23: #{residual_layer.5} parent=11 // pred_region
          _
        $region24: #{residual_layer.5} parent=11 // pred_fallthru
          _
        // Predicated region
        $region25: #{residual_layer.5} parent=11 // pred_check
          %p236 = pneg %p142
        $region26: #{residual_layer.5} parent=11 // pred_check_branch
          %238 = sbr.rel (%p236) target = $region28
        $region27: #{residual_layer.5} parent=11 // pred_region
          _
        $region28: #{residual_layer.5} parent=11 // pred_fallthru
          _
        // Predicated region
        $region29: #{residual_layer.5} parent=11 // pred_check
          %p239 = pneg %p163
        $region30: #{residual_layer.5} parent=11 // pred_check_branch
          %241 = sbr.rel (%p239) target = $region32
        $region31: #{residual_layer.5} parent=11 // pred_region
          _
        $region32: #{residual_layer.5} parent=11 // pred_fallthru
          _
        // Predicated region
        $region33: #{residual_layer.5} parent=11 // pred_check
          %p242 = pneg %p184
        $region34: #{residual_layer.5} parent=11 // pred_check_branch
          %244 = sbr.rel (%p242) target = $region36
        $region35: #{residual_layer.5} parent=11 // pred_region
          _
        $region36: #{residual_layer.5} parent=11 // pred_fallthru
          _
      $region12: #{residual_layer.5} parent=5 // pred_fallthru
        _
      %p245 = scmp.lt.s32.totalorder %s18, 2
      // Predicated region
      $region37: #{residual_layer.5} parent=5 // pred_check
        %p246 = pneg %p245
      $region38: #{residual_layer.5} parent=5 // pred_check_branch
        %248 = sbr.rel (%p246) target = $region40
      $region39: #{residual_layer.5} parent=5 // pred_region
        // Predicated region
        $region41: #{residual_layer.5} parent=39 // pred_check
          %p249 = pneg %p52
        $region42: #{residual_layer.5} parent=39 // pred_check_branch
          %251 = sbr.rel (%p249) target = $region44
        $region43: #{residual_layer.5} parent=39 // pred_region
          %p252 = scmp.lt.s32.totalorder %s25, 1
          %s253 = scalar_select %p252, %s25, 1
          %p254 = scmp.lt.s32.totalorder %s26, 0
          %s255 = scalar_select %p254, %s26, 0
          %s256 = sadd.s32 %s255, %s253
          %s257 = smul.addr %s256, 4
          %s258 = scalar_lea.vmem %s0, %s257
        $region44: #{residual_layer.5} parent=39 // pred_fallthru
          _
      $region40: #{residual_layer.5} parent=5 // pred_fallthru
        _
      %p259 = scmp.le.s32.totalorder 1, %s18
      %p260 = scmp.lt.s32.totalorder %s18, 3
      %p261 = pnand %p259, %p260
      %p262 = pneg %p261
      // Predicated region
      $region45: #{residual_layer.5} parent=5 // pred_check
        _
      $region46: #{residual_layer.5} parent=5 // pred_check_branch
        %264 = sbr.rel (%p261) target = $region48
      $region47: #{residual_layer.5} parent=5 // pred_region
        %s265 = ssub.s32 %s18, 1
        %p266 = scmp.lt.s32.totalorder %s27, 1
        %s267 = scalar_select %p266, %s27, 1
        %p268 = scmp.lt.s32.totalorder %s28, 0
        %s269 = scalar_select %p268, %s28, 0
        %s270 = sadd.s32 %s269, %s267
        %s271 = smul.addr %s270, 4
        %s272 = scalar_lea.vmem %s0, %s271
        %p273 = pneg %p58
        %p274 = pneg %p55
        %p275 = pneg %p79
        %p276 = pneg %p76
        %p277 = pneg %p100
        %p278 = pneg %p97
        %p279 = pneg %p121
        %p280 = pneg %p118
        %p281 = pneg %p142
        %p282 = pneg %p139
        %p283 = pneg %p163
        %p284 = pneg %p160
        %p285 = pneg %p184
        %p286 = pneg %p181
        %p287 = pneg %p212
        %p288 = pneg %p209
        %s289 = sand.u32 %s199, 1
        %s290 = scalar_lea.sflag [#allocation5], %s289
        %s291 = sand.u32 %s199, 1
        %s292 = smul.addr %s291, 4
        %s293 = scalar_lea.vmem [#allocation4], %s292
        %p294 = scmp.lt.s32.totalorder %s27, 1
        %s295 = scalar_select %p294, %s27, 1
        %p296 = scmp.lt.s32.totalorder %s28, 0
        %s297 = scalar_select %p296, %s28, 0
        %s298 = sadd.s32 %s297, %s295
        %s299 = smul.addr %s298, 4
        %s300 = scalar_lea.vmem %s0, %s299
        %v301 = vld [vmem:[%s300] sm:$0xf]
        %v302 = vld [vmem:[%s1] sm:$0xff]
        %v303 = vld [vmem:[%s2] sm:$0xff]
        %305 = vset.pattern.permute.xlu0 0
        %306 = vperm.xlu0 %305, %v303
        %v307 = vpop.permute.xlu0 %306
        %vm309 = vcmask 31744
        %v311 = vsel %vm309, %v302, 0
        %vm313 = vcmask 1043456
        %v315 = vsel %vm313, %v301, 0
        %317 = vmatpush.msra.mxu0 0.0
        %318 = vmatpush.msra.mxu0 0.0
        %319 = vmatpush.msra.mxu0 0.0
        %320 = vmatpush.msra.mxu0 0.0
        %321 = vmatpush.msra.mxu0 0.0
        %322 = vmatpush.msra.mxu0 0.0
        %323 = vmatpush.msra.mxu0 0.0
        %324 = vmatpush.msra.mxu0 0.0
        %325 = vmatpush.msra.mxu0 0.0
        %326 = vmatpush.msra.mxu0 0.0
        %327 = vmatpush.msra.mxu0 0.0
        %328 = vmatpush.msra.mxu0 0.0
        %329 = vmatpush.msra.mxu0 0.0
        %330 = vmatpush.msra.mxu0 0.0
        %331 = vmatpush.msra.mxu0 0.0
        %332 = vmatpush.msra.mxu0 %v315
        %333 = vmatmul.f32.gmra.mxu0 %v311
        %v334 = vpop.f32.mrf.mxu0
        %v335 = vadd.f32 %v307, %v334
        %336 = vdwg.mxu0
        %s337 = sld [smem:[#allocation2]]
        %vm338 = vcmp.gt.f32.partialorder %v335, 0.0
        %v339 = vstv %s337
        %v340 = vmul.f32 %v339, %v335
        %v341 = vsel %vm338, %v335, %v340
        %v342 = vld [vmem:[%s4] sm:$0xf]
        %v343 = vld [vmem:[%s5] sm:$0xf]
        %345 = vset.pattern.permute.xlu0 0
        %346 = vperm.xlu0 %345, %v343
        %v347 = vpop.permute.xlu0 %346
        %vm349 = vcmask 64512
        %v351 = vsel %vm349, %v342, 0
        %353 = vmatpush.msra.mxu0 0.0
        %354 = vmatpush.msra.mxu0 0.0
        %355 = vmatpush.msra.mxu0 0.0
        %356 = vmatpush.msra.mxu0 0.0
        %357 = vmatpush.msra.mxu0 0.0
        %358 = vmatpush.msra.mxu0 0.0
        %359 = vmatpush.msra.mxu0 0.0
        %360 = vmatpush.msra.mxu0 0.0
        %361 = vmatpush.msra.mxu0 0.0
        %362 = vmatpush.msra.mxu0 0.0
        %363 = vmatpush.msra.mxu0 0.0
        %364 = vmatpush.msra.mxu0 0.0
        %365 = vmatpush.msra.mxu0 0.0
        %366 = vmatpush.msra.mxu0 0.0
        %367 = vmatpush.msra.mxu0 0.0
        %368 = vmatpush.msra.mxu0 %v341
        %369 = vmatmul.f32.gmra.mxu0 %v351
        %v370 = vpop.f32.mrf.mxu0
        %v371 = vadd.f32 %v347, %v370
        %372 = vdwg.mxu0
        %s373 = sld [smem:[#allocation3]]
        %vm374 = vcmp.gt.f32.partialorder %v371, 0.0
        %v375 = vstv %s373
        %v376 = vmul.f32 %v375, %v371
        %v377 = vsel %vm374, %v371, %v376
        %v378 = vadd.f32 %v301, %v377
        %379 = vst [vmem:[%s293] sm:$0xf] %v378
        %s380 = sand.u32 %s199, 1
        %s381 = scalar_lea.sflag [#allocation5], %s380
        %s382 = sand.u32 %s199, 1
        %s383 = smul.addr %s382, 4
        %s384 = scalar_lea.vmem [#allocation4], %s383
        // Predicated region
        $region49: #{residual_layer.5} parent=47 // pred_check
          %p385 = pneg %p209
        $region50: #{residual_layer.5} parent=47 // pred_check_branch
          %387 = sbr.rel (%p385) target = $region52
        $region51: #{residual_layer.5} parent=47 // pred_region
          %389 = vsyncadd %s381, 0
          %s390 = sadd.s32 %s28, %s27
          %s391 = smul.addr %s390, 4
          %s392 = scalar_lea.hbm %s7, %s391
          %s394 = sshll.u32 %s384, 4
          %s395 = int_to_ptr.vmem [resolvable:$true] %s394
          %s396 = sshll.u32 %s392, 4
          %s397 = int_to_ptr.hbm [resolvable:$true] %s396
          %399 = dma.vmem_to_hbm [thread:$0]  %s395, 64, %s397, %s381
        $region52: #{residual_layer.5} parent=47 // pred_fallthru
          _
      $region48: #{residual_layer.5} parent=5 // pred_fallthru
        _
      %p400 = scmp.le.s32.totalorder 2, %s18
      // Predicated region
      $region53: #{residual_layer.5} parent=5 // pred_check
        %p401 = pneg %p400
      $region54: #{residual_layer.5} parent=5 // pred_check_branch
        %403 = sbr.rel (%p401) target = $region56
      $region55: #{residual_layer.5} parent=5 // pred_region
        %s404 = ssub.s32 %s18, 2
        // Predicated region
        $region57: #{residual_layer.5} parent=55 // pred_check
          %p405 = pneg %p215
        $region58: #{residual_layer.5} parent=55 // pred_check_branch
          %407 = sbr.rel (%p405) target = $region60
        $region59: #{residual_layer.5} parent=55 // pred_region
          %s408 = sand.u32 %s200, 1
          %s409 = scalar_lea.sflag [#allocation5], %s408
          %s410 = sand.u32 %s200, 1
          %s411 = smul.addr %s410, 4
          %s412 = scalar_lea.vmem [#allocation4], %s411
          %414 = dma.done %s409, 64
        $region60: #{residual_layer.5} parent=55 // pred_fallthru
          _
      $region56: #{residual_layer.5} parent=5 // pred_fallthru
        _
    $region6: #{residual_layer.5} parent=1 // loop_footer
      %s22 = sadd.s32 1, %s18
    $region7: #{residual_layer.5} parent=1 // loop_footer_branch
      %17 = sbr.rel target = $region3
    $region8: #{residual_layer.5} parent=1 // loop_exit
      _
    %415 = vsyncpa [#allocation5], 1
    %s416 = scalar_lea.sflag [#allocation5], 1
    %417 = vsyncpa %s416, 1

</llo_original>
